<compile_context>
chip_gen: v5e
topology: v5e:2x2
jax: 0.10.0
libtpu: 0.0.40
codegen_flags: <defaults>
</compile_context>

<pallas_src>
import functools
import math

import jax
import jax.numpy as jnp
from jax.experimental import pallas as pl
from jax.experimental.pallas import tpu as pltpu


# ----------------------------- Pallas kernel ------------------------------ #

def _encoder_layer_kernel(num_heads, eps,
                          x_ref, mask_ref,
                          g1_ref, b1_ref,
                          wq_ref, bq_ref, wk_ref, bk_ref, wv_ref, bv_ref,
                          wo_ref, bo_ref,
                          g2_ref, b2_ref,
                          w1_ref, fb1_ref, w2_ref, fb2_ref,
                          o_ref):
    f32 = jnp.float32
    bf16 = jnp.bfloat16

    x = x_ref[...].astype(f32)                       # (T, D) — LN/residual math in f32
    mask = mask_ref[...]                             # (1, T) f32; 1.0 = attend, 0.0 = masked
    mask_bias = jnp.where(mask > 0.0, 0.0, -1e9).astype(f32)   # (1, T), broadcasts over queries

    def layer_norm(v, g, b):
        mu = jnp.mean(v, axis=-1, keepdims=True)
        var = jnp.mean((v - mu) ** 2, axis=-1, keepdims=True)
        return (v - mu) * jax.lax.rsqrt(var + eps) * g + b

    # ---------------- multi-head self attention (pre-norm) ---------------- #
    h = layer_norm(x, g1_ref[...], b1_ref[...])      # (T, D) f32
    h_b = h.astype(bf16)                             # MXU input dtype

    attn = jnp.zeros(x.shape, f32)                   # (T, D) output-projection accumulator
    for hh in range(num_heads):
        # Static unroll. All per-head indexing is along the LEADING axis of the
        # weight stacks (cheap tile-row selection) — no lane slices, no concat,
        # no K transpose.  Wq/bq are pre-scaled by 1/sqrt(d_k) in the wrapper.
        q = jnp.dot(h_b, wq_ref[hh], preferred_element_type=f32) + bq_ref[hh]   # (T, dk) f32
        k = jnp.dot(h_b, wk_ref[hh], preferred_element_type=f32) + bk_ref[hh]   # (T, dk)
        v = jnp.dot(h_b, wv_ref[hh], preferred_element_type=f32) + bv_ref[hh]   # (T, dk)

        # scores: contract last dim of both operands (transposed-RHS form).
        s = jax.lax.dot_general(q.astype(bf16), k.astype(bf16),
                                dimension_numbers=(((1,), (1,)), ((), ())),
                                preferred_element_type=f32)                      # (T, T)
        s = s + mask_bias
        s = s - jnp.max(s, axis=-1, keepdims=True)                               # f32 softmax
        p = jnp.exp(s)
        p = p * pl.reciprocal(jnp.sum(p, axis=-1, keepdims=True), approx=True)

        hv = jnp.dot(p.astype(bf16), v.astype(bf16),
                     preferred_element_type=f32)                                 # (T, dk)
        # fold this head's slice of the output projection: sum_h head_h @ Wo[h]
        attn = attn + jnp.dot(hv.astype(bf16), wo_ref[hh],
                              preferred_element_type=f32)                        # (T, D)

    attn = attn + bo_ref[...]
    x = x + attn                                     # residual 1

    # ------------------------- feed forward (pre-norm) --------------------- #
    h2 = layer_norm(x, g2_ref[...], b2_ref[...])
    ff = jnp.dot(h2.astype(bf16), w1_ref[...], preferred_element_type=f32) + fb1_ref[...]
    ff = jnp.maximum(ff, 0.0)                        # ReLU
    ff = jnp.dot(ff.astype(bf16), w2_ref[...], preferred_element_type=f32) + fb2_ref[...]

    o_ref[...] = (x + ff).astype(o_ref.dtype)        # residual 2


def encoder_layer_pallas(x, mask, kp, *, num_heads, d_k):
    """x: (B, T, D) bf16, mask: (B, 1, T) f32, kp: kernel-ready layer params."""
    B, T, D = x.shape
    H = num_heads
    d_ff = kp["w1"].shape[1]

    def rep(shape):
        # whole-array block, replicated across the batch grid (resident weights)
        return pl.BlockSpec(shape, lambda b: (0,) * len(shape))

    kernel = functools.partial(_encoder_layer_kernel, num_heads, 1e-5)

    return pl.pallas_call(
        kernel,
        out_shape=jax.ShapeDtypeStruct((B, T, D), x.dtype),
        grid_spec=pltpu.PrefetchScalarGridSpec(
            num_scalar_prefetch=0,
            grid=(B,),
            in_specs=[
                # leading batch dim squeezed (None == pl.Squeezed()): kernel sees 2-D refs
                pl.BlockSpec((None, T, D), lambda b: (b, 0, 0)),     # x
                pl.BlockSpec((None, 1, T), lambda b: (b, 0, 0)),     # mask
                rep((1, D)), rep((1, D)),                            # ln1 gamma/beta
                rep((H, D, d_k)), rep((H, 1, d_k)),                  # Wq (pre-scaled), bq
                rep((H, D, d_k)), rep((H, 1, d_k)),                  # Wk, bk
                rep((H, D, d_k)), rep((H, 1, d_k)),                  # Wv, bv
                rep((H, d_k, D)), rep((1, D)),                       # Wo (head-stacked), bo
                rep((1, D)), rep((1, D)),                            # ln2 gamma/beta
                rep((D, d_ff)), rep((1, d_ff)),                      # W1, b1
                rep((d_ff, D)), rep((1, D)),                         # W2, b2
            ],
            out_specs=pl.BlockSpec((None, T, D), lambda b: (b, 0, 0)),
        ),
        compiler_params=pltpu.CompilerParams(
            dimension_semantics=("parallel",),
            vmem_limit_bytes=64 * 1024 * 1024),
    )(x, mask,
      kp["g1"], kp["b1"],
      kp["wq3"], kp["bq3"], kp["wk3"], kp["bk3"], kp["wv3"], kp["bv3"],
      kp["wo3"], kp["bo"],
      kp["g2"], kp["b2"],
      kp["w1"], kp["fb1"], kp["w2"], kp["fb2"])


# ------------------------------ JAX glue ----------------------------------- #

def sinusoidal_pos_table(n_position, d_model):
    pos = jnp.arange(n_position, dtype=jnp.float32)[:, None]          # (P, 1)
    i = jnp.arange(d_model, dtype=jnp.float32)[None, :]               # (1, D)
    angle = pos / jnp.power(10000.0, 2.0 * jnp.floor(i / 2.0) / d_model)
    even = (jnp.arange(d_model) % 2) == 0
    return jnp.where(even[None, :], jnp.sin(angle), jnp.cos(angle))   # (P, D)


def prepare_kernel_params(lp, *, num_heads, d_k, compute_dtype=jnp.bfloat16):
    """Re-layout per-layer weights for the kernel (head-leading stacks, bf16 matmul
    weights, 1/sqrt(d_k) folded into Wq/bq).  Pure-JAX, runs outside the kernel."""
    D = lp["wq"].shape[0]
    H = num_heads
    inv = 1.0 / math.sqrt(d_k)

    def split_w(w):   # (D, H*dk) -> (H, D, dk)
        return jnp.transpose(w.reshape(D, H, d_k), (1, 0, 2))

    def split_b(b):   # (1, H*dk) -> (H, 1, dk)
        return jnp.transpose(b.reshape(1, H, d_k), (1, 0, 2))

    return {
        "g1": lp["g1"], "b1": lp["b1"],
        "wq3": (split_w(lp["wq"]) * inv).astype(compute_dtype),
        "bq3": split_b(lp["bq"]) * inv,
        "wk3": split_w(lp["wk"]).astype(compute_dtype),
        "bk3": split_b(lp["bk"]),
        "wv3": split_w(lp["wv"]).astype(compute_dtype),
        "bv3": split_b(lp["bv"]),
        "wo3": lp["wo"].reshape(H, d_k, D).astype(compute_dtype),   # (H*dk, D) -> (H, dk, D)
        "bo": lp["bo"],
        "g2": lp["g2"], "b2": lp["b2"],
        "w1": lp["w1"].astype(compute_dtype), "fb1": lp["fb1"],
        "w2": lp["w2"].astype(compute_dtype), "fb2": lp["fb2"],
    }


def init_params(key, vocab, d_model, num_heads, d_k, d_ff, layers):
    keys = jax.random.split(key, 1 + layers)
    params = {"emb": jax.random.normal(keys[0], (vocab, d_model), jnp.float32) * 0.02,
              "layers": []}
    Hdk = num_heads * d_k
    for li in range(layers):
        ks = jax.random.split(keys[1 + li], 6)
        s = 0.02
        lp = {
            "g1": jnp.ones((1, d_model), jnp.float32),
            "b1": jnp.zeros((1, d_model), jnp.float32),
            "wq": jax.random.normal(ks[0], (d_model, Hdk), jnp.float32) * s,
            "bq": jnp.zeros((1, Hdk), jnp.float32),
            "wk": jax.random.normal(ks[1], (d_model, Hdk), jnp.float32) * s,
            "bk": jnp.zeros((1, Hdk), jnp.float32),
            "wv": jax.random.normal(ks[2], (d_model, Hdk), jnp.float32) * s,
            "bv": jnp.zeros((1, Hdk), jnp.float32),
            "wo": jax.random.normal(ks[3], (Hdk, d_model), jnp.float32) * s,
            "bo": jnp.zeros((1, d_model), jnp.float32),
            "g2": jnp.ones((1, d_model), jnp.float32),
            "b2": jnp.zeros((1, d_model), jnp.float32),
            "w1": jax.random.normal(ks[4], (d_model, d_ff), jnp.float32) * s,
            "fb1": jnp.zeros((1, d_ff), jnp.float32),
            "w2": jax.random.normal(ks[5], (d_ff, d_model), jnp.float32) * s,
            "fb2": jnp.zeros((1, d_model), jnp.float32),
        }
        params["layers"].append(lp)
    return params


def encoder_forward(params, src_seq, src_mask, *, d_model, num_heads, d_k, word_max_len,
                    compute_dtype=jnp.bfloat16):
    # Embedding lookup (glue) + scale + sinusoidal positional encoding; dropout = identity.
    T = src_seq.shape[1]
    x = jnp.take(params["emb"], src_seq, axis=0) * (d_model ** 0.5)    # (B, T, D) f32
    x = x + sinusoidal_pos_table(word_max_len, d_model)[None, :T, :]
    x = x.astype(compute_dtype)                                        # bf16 activations
    mask = src_mask.astype(jnp.float32)
    # TODO(synk): at real sizes, keep x resident / prefetch layer i+1 weights
    #             (P10 cross-call futures) instead of round-tripping HBM per layer.
    for lp in params["layers"]:
        kp = prepare_kernel_params(lp, num_heads=num_heads, d_k=d_k,
                                   compute_dtype=compute_dtype)
        x = encoder_layer_pallas(x, mask, kp, num_heads=num_heads, d_k=d_k)
    return x.astype(jnp.float32)


# ------------------------- pure-JAX reference ------------------------------ #

def _ref_layer(x, mask, lp, num_heads, d_k):
    def ln(v, g, b):
        mu = v.mean(-1, keepdims=True)
        var = ((v - mu) ** 2).mean(-1, keepdims=True)
        return (v - mu) / jnp.sqrt(var + 1e-5) * g + b

    B, T, D = x.shape
    h = ln(x, lp["g1"], lp["b1"])
    q = h @ lp["wq"] + lp["bq"]
    k = h @ lp["wk"] + lp["bk"]
    v = h @ lp["wv"] + lp["bv"]
    q = q.reshape(B, T, num_heads, d_k).transpose(0, 2, 1, 3)
    k = k.reshape(B, T, num_heads, d_k).transpose(0, 2, 1, 3)
    v = v.reshape(B, T, num_heads, d_k).transpose(0, 2, 1, 3)
    sc = jnp.einsum("bhqd,bhkd->bhqk", q, k) / math.sqrt(d_k)
    sc = sc + jnp.where(mask[:, None, :, :] > 0, 0.0, -1e9)
    p = jax.nn.softmax(sc, axis=-1)
    o = jnp.einsum("bhqk,bhkd->bhqd", p, v).transpose(0, 2, 1, 3).reshape(B, T, -1)
    x = x + (o @ lp["wo"] + lp["bo"])
    h2 = ln(x, lp["g2"], lp["b2"])
    ff = jnp.maximum(h2 @ lp["w1"] + lp["fb1"], 0.0) @ lp["w2"] + lp["fb2"]
    return x + ff


def encoder_forward_ref(params, src_seq, src_mask, *, d_model, num_heads, d_k, word_max_len):
    T = src_seq.shape[1]
    x = jnp.take(params["emb"], src_seq, axis=0) * (d_model ** 0.5)
    x = x + sinusoidal_pos_table(word_max_len, d_model)[None, :T, :]
    for lp in params["layers"]:
        x = _ref_layer(x, src_mask, lp, num_heads, d_k)
    return x


# --------------------------------- main ------------------------------------ #

if __name__ == "__main__":
    B, T = 2, 8
    vocab, word_max_len = 50, 16
    d_model, num_heads, d_k, d_ff, layers = 32, 4, 8, 64, 2

    key = jax.random.PRNGKey(0)
    k_param, k_seq = jax.random.split(key)
    params = init_params(k_param, vocab, d_model, num_heads, d_k, d_ff, layers)

    src_seq = jax.random.randint(k_seq, (B, T), 0, vocab, dtype=jnp.int32)
    src_mask = jnp.ones((B, 1, T), jnp.float32)      # all positions valid
    src_mask = src_mask.at[1, 0, T - 2:].set(0.0)    # mask out tail of 2nd example

    out = encoder_forward(params, src_seq, src_mask,
                          d_model=d_model, num_heads=num_heads,
                          d_k=d_k, word_max_len=word_max_len)
    out = jax.block_until_ready(out)

    ref = encoder_forward_ref(params, src_seq, src_mask,
                              d_model=d_model, num_heads=num_heads,
                              d_k=d_k, word_max_len=word_max_len)
    assert out.shape == (B, T, d_model)
    # bf16 activations/weights in the kernel vs f32 reference -> relaxed tolerance.
    assert jnp.allclose(out, ref, rtol=2e-2, atol=2e-2), "mismatch vs JAX reference"

    print("KERNEL_OK")
</pallas_src>

<mosaic_0001>
module attributes {stable_mosaic.version = 11 : i64} {
  func.func @_encoder_layer_kernel(%arg0: i32, %arg1: memref<1x8x32xbf16, #tpu.memory_space<vmem>>, %arg2: memref<1x1x8xf32, #tpu.memory_space<vmem>>, %arg3: memref<1x32xf32, #tpu.memory_space<vmem>>, %arg4: memref<1x32xf32, #tpu.memory_space<vmem>>, %arg5: memref<4x32x8xbf16, #tpu.memory_space<vmem>>, %arg6: memref<4x1x8xf32, #tpu.memory_space<vmem>>, %arg7: memref<4x32x8xbf16, #tpu.memory_space<vmem>>, %arg8: memref<4x1x8xf32, #tpu.memory_space<vmem>>, %arg9: memref<4x32x8xbf16, #tpu.memory_space<vmem>>, %arg10: memref<4x1x8xf32, #tpu.memory_space<vmem>>, %arg11: memref<4x8x32xbf16, #tpu.memory_space<vmem>>, %arg12: memref<1x32xf32, #tpu.memory_space<vmem>>, %arg13: memref<1x32xf32, #tpu.memory_space<vmem>>, %arg14: memref<1x32xf32, #tpu.memory_space<vmem>>, %arg15: memref<32x64xbf16, #tpu.memory_space<vmem>>, %arg16: memref<1x64xf32, #tpu.memory_space<vmem>>, %arg17: memref<64x32xbf16, #tpu.memory_space<vmem>>, %arg18: memref<1x32xf32, #tpu.memory_space<vmem>>, %arg19: memref<1x8x32xbf16, #tpu.memory_space<vmem>>) attributes {dimension_semantics = [#tpu.dimension_semantics<parallel>], iteration_bounds = array<i64: 2>, scalar_prefetch = 0 : i64, scratch_operands = 0 : i64, tpu.core_type = #tpu.core_type<tc>, window_params = [{transform_indices = @transform_0, window_bounds = array<i64: 1, 8, 32>}, {transform_indices = @transform_1, window_bounds = array<i64: 1, 1, 8>}, {pipeline_mode = #tpu.pipeline_mode<synchronous>, transform_indices = @transform_2, window_bounds = array<i64: 1, 32>}, {pipeline_mode = #tpu.pipeline_mode<synchronous>, transform_indices = @transform_3, window_bounds = array<i64: 1, 32>}, {pipeline_mode = #tpu.pipeline_mode<synchronous>, transform_indices = @transform_4, window_bounds = array<i64: 4, 32, 8>}, {pipeline_mode = #tpu.pipeline_mode<synchronous>, transform_indices = @transform_5, window_bounds = array<i64: 4, 1, 8>}, {pipeline_mode = #tpu.pipeline_mode<synchronous>, transform_indices = @transform_6, window_bounds = array<i64: 4, 32, 8>}, {pipeline_mode = #tpu.pipeline_mode<synchronous>, transform_indices = @transform_7, window_bounds = array<i64: 4, 1, 8>}, {pipeline_mode = #tpu.pipeline_mode<synchronous>, transform_indices = @transform_8, window_bounds = array<i64: 4, 32, 8>}, {pipeline_mode = #tpu.pipeline_mode<synchronous>, transform_indices = @transform_9, window_bounds = array<i64: 4, 1, 8>}, {pipeline_mode = #tpu.pipeline_mode<synchronous>, transform_indices = @transform_10, window_bounds = array<i64: 4, 8, 32>}, {pipeline_mode = #tpu.pipeline_mode<synchronous>, transform_indices = @transform_11, window_bounds = array<i64: 1, 32>}, {pipeline_mode = #tpu.pipeline_mode<synchronous>, transform_indices = @transform_12, window_bounds = array<i64: 1, 32>}, {pipeline_mode = #tpu.pipeline_mode<synchronous>, transform_indices = @transform_13, window_bounds = array<i64: 1, 32>}, {pipeline_mode = #tpu.pipeline_mode<synchronous>, transform_indices = @transform_14, window_bounds = array<i64: 32, 64>}, {pipeline_mode = #tpu.pipeline_mode<synchronous>, transform_indices = @transform_15, window_bounds = array<i64: 1, 64>}, {pipeline_mode = #tpu.pipeline_mode<synchronous>, transform_indices = @transform_16, window_bounds = array<i64: 64, 32>}, {pipeline_mode = #tpu.pipeline_mode<synchronous>, transform_indices = @transform_17, window_bounds = array<i64: 1, 32>}, {transform_indices = @transform_18, window_bounds = array<i64: 1, 8, 32>}]} {
    %c0 = arith.constant 0 : index
    %c0_0 = arith.constant 0 : index
    %c0_1 = arith.constant 0 : index
    %0 = vector.load %arg1[%c0, %c0_0, %c0_1] : memref<1x8x32xbf16, #tpu.memory_space<vmem>>, vector<1x8x32xbf16>
    %1 = vector.shape_cast %0 : vector<1x8x32xbf16> to vector<8x32xbf16>
    %2 = arith.extf %1 : vector<8x32xbf16> to vector<8x32xf32>
    %c0_2 = arith.constant 0 : index
    %c0_3 = arith.constant 0 : index
    %c0_4 = arith.constant 0 : index
    %3 = vector.load %arg2[%c0_2, %c0_3, %c0_4] : memref<1x1x8xf32, #tpu.memory_space<vmem>>, vector<1x1x8xf32>
    %4 = vector.shape_cast %3 : vector<1x1x8xf32> to vector<1x8xf32>
    %cst = arith.constant 0.000000e+00 : f32
    %5 = vector.broadcast %cst : f32 to vector<1x8xf32>
    %6 = arith.cmpf ogt, %4, %5 : vector<1x8xf32>
    %cst_5 = arith.constant 0.000000e+00 : f32
    %cst_6 = arith.constant -1.000000e+09 : f32
    %7 = vector.broadcast %cst_5 : f32 to vector<1x8xf32>
    %8 = vector.broadcast %cst_6 : f32 to vector<1x8xf32>
    %9 = arith.select %6, %7, %8 : vector<1x8xi1>, vector<1x8xf32>
    %c0_7 = arith.constant 0 : index
    %c0_8 = arith.constant 0 : index
    %10 = vector.load %arg3[%c0_7, %c0_8] : memref<1x32xf32, #tpu.memory_space<vmem>>, vector<1x32xf32>
    %c0_9 = arith.constant 0 : index
    %c0_10 = arith.constant 0 : index
    %11 = vector.load %arg4[%c0_9, %c0_10] : memref<1x32xf32, #tpu.memory_space<vmem>>, vector<1x32xf32>
    %cst_11 = arith.constant dense<0.000000e+00> : vector<8xf32>
    %12 = vector.multi_reduction <add>, %2, %cst_11 [1] : vector<8x32xf32> to vector<8xf32>
    %13 = vector.shape_cast %12 : vector<8xf32> to vector<8x1xf32>
    %cst_12 = arith.constant 3.200000e+01 : f32
    %14 = vector.broadcast %cst_12 : f32 to vector<8x1xf32>
    %15 = arith.divf %13, %14 : vector<8x1xf32>
    %16 = vector.broadcast %15 : vector<8x1xf32> to vector<8x32xf32>
    %17 = arith.subf %2, %16 : vector<8x32xf32>
    %18 = arith.mulf %17, %17 : vector<8x32xf32>
    %cst_13 = arith.constant dense<0.000000e+00> : vector<8xf32>
    %19 = vector.multi_reduction <add>, %18, %cst_13 [1] : vector<8x32xf32> to vector<8xf32>
    %20 = vector.shape_cast %19 : vector<8xf32> to vector<8x1xf32>
    %cst_14 = arith.constant 3.200000e+01 : f32
    %21 = vector.broadcast %cst_14 : f32 to vector<8x1xf32>
    %22 = arith.divf %20, %21 : vector<8x1xf32>
    %23 = vector.broadcast %15 : vector<8x1xf32> to vector<8x32xf32>
    %24 = arith.subf %2, %23 : vector<8x32xf32>
    %cst_15 = arith.constant 9.99999974E-6 : f32
    %25 = vector.broadcast %cst_15 : f32 to vector<8x1xf32>
    %26 = arith.addf %22, %25 : vector<8x1xf32>
    %27 = math.rsqrt %26 : vector<8x1xf32>
    %28 = vector.broadcast %27 : vector<8x1xf32> to vector<8x32xf32>
    %29 = arith.mulf %24, %28 : vector<8x32xf32>
    %30 = vector.broadcast %10 : vector<1x32xf32> to vector<8x32xf32>
    %31 = arith.mulf %29, %30 : vector<8x32xf32>
    %32 = vector.broadcast %11 : vector<1x32xf32> to vector<8x32xf32>
    %33 = arith.addf %31, %32 : vector<8x32xf32>
    %34 = arith.truncf %33 : vector<8x32xf32> to vector<8x32xbf16>
    %cst_16 = arith.constant 0.000000e+00 : f32
    %35 = vector.broadcast %cst_16 : f32 to vector<8x32xf32>
    %c0_17 = arith.constant 0 : index
    %c0_18 = arith.constant 0 : index
    %c0_19 = arith.constant 0 : index
    %36 = vector.load %arg5[%c0_17, %c0_18, %c0_19] : memref<4x32x8xbf16, #tpu.memory_space<vmem>>, vector<1x32x8xbf16>
    %37 = vector.shape_cast %36 : vector<1x32x8xbf16> to vector<32x8xbf16>
    %cst_20 = arith.constant dense<0.000000e+00> : vector<8x8xf32>
    %38 = tpu.matmul %34, %37, %cst_20 {dimension_numbers = #tpu.dot_dimension_numbers<[1], [0], [0], [1], [0, 0, 1, 1], [], []>} : vector<8x32xbf16>, vector<32x8xbf16>, vector<8x8xf32> -> vector<8x8xf32>
    %c0_21 = arith.constant 0 : index
    %c0_22 = arith.constant 0 : index
    %c0_23 = arith.constant 0 : index
    %39 = vector.load %arg6[%c0_21, %c0_22, %c0_23] : memref<4x1x8xf32, #tpu.memory_space<vmem>>, vector<1x1x8xf32>
    %40 = vector.shape_cast %39 : vector<1x1x8xf32> to vector<1x8xf32>
    %41 = vector.broadcast %40 : vector<1x8xf32> to vector<8x8xf32>
    %42 = arith.addf %38, %41 : vector<8x8xf32>
    %c0_24 = arith.constant 0 : index
    %c0_25 = arith.constant 0 : index
    %c0_26 = arith.constant 0 : index
    %43 = vector.load %arg7[%c0_24, %c0_25, %c0_26] : memref<4x32x8xbf16, #tpu.memory_space<vmem>>, vector<1x32x8xbf16>
    %44 = vector.shape_cast %43 : vector<1x32x8xbf16> to vector<32x8xbf16>
    %cst_27 = arith.constant dense<0.000000e+00> : vector<8x8xf32>
    %45 = tpu.matmul %34, %44, %cst_27 {dimension_numbers = #tpu.dot_dimension_numbers<[1], [0], [0], [1], [0, 0, 1, 1], [], []>} : vector<8x32xbf16>, vector<32x8xbf16>, vector<8x8xf32> -> vector<8x8xf32>
    %c0_28 = arith.constant 0 : index
    %c0_29 = arith.constant 0 : index
    %c0_30 = arith.constant 0 : index
    %46 = vector.load %arg8[%c0_28, %c0_29, %c0_30] : memref<4x1x8xf32, #tpu.memory_space<vmem>>, vector<1x1x8xf32>
    %47 = vector.shape_cast %46 : vector<1x1x8xf32> to vector<1x8xf32>
    %48 = vector.broadcast %47 : vector<1x8xf32> to vector<8x8xf32>
    %49 = arith.addf %45, %48 : vector<8x8xf32>
    %c0_31 = arith.constant 0 : index
    %c0_32 = arith.constant 0 : index
    %c0_33 = arith.constant 0 : index
    %50 = vector.load %arg9[%c0_31, %c0_32, %c0_33] : memref<4x32x8xbf16, #tpu.memory_space<vmem>>, vector<1x32x8xbf16>
    %51 = vector.shape_cast %50 : vector<1x32x8xbf16> to vector<32x8xbf16>
    %cst_34 = arith.constant dense<0.000000e+00> : vector<8x8xf32>
    %52 = tpu.matmul %34, %51, %cst_34 {dimension_numbers = #tpu.dot_dimension_numbers<[1], [0], [0], [1], [0, 0, 1, 1], [], []>} : vector<8x32xbf16>, vector<32x8xbf16>, vector<8x8xf32> -> vector<8x8xf32>
    %c0_35 = arith.constant 0 : index
    %c0_36 = arith.constant 0 : index
    %c0_37 = arith.constant 0 : index
    %53 = vector.load %arg10[%c0_35, %c0_36, %c0_37] : memref<4x1x8xf32, #tpu.memory_space<vmem>>, vector<1x1x8xf32>
    %54 = vector.shape_cast %53 : vector<1x1x8xf32> to vector<1x8xf32>
    %55 = vector.broadcast %54 : vector<1x8xf32> to vector<8x8xf32>
    %56 = arith.addf %52, %55 : vector<8x8xf32>
    %57 = arith.truncf %42 : vector<8x8xf32> to vector<8x8xbf16>
    %58 = arith.truncf %49 : vector<8x8xf32> to vector<8x8xbf16>
    %cst_38 = arith.constant dense<0.000000e+00> : vector<8x8xf32>
    %59 = tpu.matmul %57, %58, %cst_38 {dimension_numbers = #tpu.dot_dimension_numbers<[1], [1], [0], [0], [0, 0, 1, 0], [], []>} : vector<8x8xbf16>, vector<8x8xbf16>, vector<8x8xf32> -> vector<8x8xf32>
    %60 = vector.broadcast %9 : vector<1x8xf32> to vector<8x8xf32>
    %61 = arith.addf %59, %60 : vector<8x8xf32>
    %cst_39 = arith.constant dense<0xFF800000> : vector<8xf32>
    %62 = vector.multi_reduction <maximumf>, %61, %cst_39 [1] : vector<8x8xf32> to vector<8xf32>
    %63 = vector.shape_cast %62 : vector<8xf32> to vector<8x1xf32>
    %64 = vector.broadcast %63 : vector<8x1xf32> to vector<8x8xf32>
    %65 = arith.subf %61, %64 : vector<8x8xf32>
    %66 = math.exp %65 : vector<8x8xf32>
    %cst_40 = arith.constant dense<0.000000e+00> : vector<8xf32>
    %67 = vector.multi_reduction <add>, %66, %cst_40 [1] : vector<8x8xf32> to vector<8xf32>
    %68 = vector.shape_cast %67 : vector<8xf32> to vector<8x1xf32>
    %69 = tpu.reciprocal %68 {approx = true} : vector<8x1xf32> -> vector<8x1xf32>
    %70 = vector.broadcast %69 : vector<8x1xf32> to vector<8x8xf32>
    %71 = arith.mulf %66, %70 : vector<8x8xf32>
    %72 = arith.truncf %71 : vector<8x8xf32> to vector<8x8xbf16>
    %73 = arith.truncf %56 : vector<8x8xf32> to vector<8x8xbf16>
    %cst_41 = arith.constant dense<0.000000e+00> : vector<8x8xf32>
    %74 = tpu.matmul %72, %73, %cst_41 {dimension_numbers = #tpu.dot_dimension_numbers<[1], [0], [0], [1], [0, 0, 1, 1], [], []>} : vector<8x8xbf16>, vector<8x8xbf16>, vector<8x8xf32> -> vector<8x8xf32>
    %75 = arith.truncf %74 : vector<8x8xf32> to vector<8x8xbf16>
    %c0_42 = arith.constant 0 : index
    %c0_43 = arith.constant 0 : index
    %c0_44 = arith.constant 0 : index
    %76 = vector.load %arg11[%c0_42, %c0_43, %c0_44] : memref<4x8x32xbf16, #tpu.memory_space<vmem>>, vector<1x8x32xbf16>
    %77 = vector.shape_cast %76 : vector<1x8x32xbf16> to vector<8x32xbf16>
    %cst_45 = arith.constant dense<0.000000e+00> : vector<8x32xf32>
    %78 = tpu.matmul %75, %77, %cst_45 {dimension_numbers = #tpu.dot_dimension_numbers<[1], [0], [0], [1], [0, 0, 1, 1], [], []>} : vector<8x8xbf16>, vector<8x32xbf16>, vector<8x32xf32> -> vector<8x32xf32>
    %79 = arith.addf %35, %78 : vector<8x32xf32>
    %c1 = arith.constant 1 : index
    %c0_46 = arith.constant 0 : index
    %c0_47 = arith.constant 0 : index
    %80 = vector.load %arg5[%c1, %c0_46, %c0_47] : memref<4x32x8xbf16, #tpu.memory_space<vmem>>, vector<1x32x8xbf16>
    %81 = vector.shape_cast %80 : vector<1x32x8xbf16> to vector<32x8xbf16>
    %cst_48 = arith.constant dense<0.000000e+00> : vector<8x8xf32>
    %82 = tpu.matmul %34, %81, %cst_48 {dimension_numbers = #tpu.dot_dimension_numbers<[1], [0], [0], [1], [0, 0, 1, 1], [], []>} : vector<8x32xbf16>, vector<32x8xbf16>, vector<8x8xf32> -> vector<8x8xf32>
    %c1_49 = arith.constant 1 : index
    %c0_50 = arith.constant 0 : index
    %c0_51 = arith.constant 0 : index
    %83 = vector.load %arg6[%c1_49, %c0_50, %c0_51] : memref<4x1x8xf32, #tpu.memory_space<vmem>>, vector<1x1x8xf32>
    %84 = vector.shape_cast %83 : vector<1x1x8xf32> to vector<1x8xf32>
    %85 = vector.broadcast %84 : vector<1x8xf32> to vector<8x8xf32>
    %86 = arith.addf %82, %85 : vector<8x8xf32>
    %c1_52 = arith.constant 1 : index
    %c0_53 = arith.constant 0 : index
    %c0_54 = arith.constant 0 : index
    %87 = vector.load %arg7[%c1_52, %c0_53, %c0_54] : memref<4x32x8xbf16, #tpu.memory_space<vmem>>, vector<1x32x8xbf16>
    %88 = vector.shape_cast %87 : vector<1x32x8xbf16> to vector<32x8xbf16>
    %cst_55 = arith.constant dense<0.000000e+00> : vector<8x8xf32>
    %89 = tpu.matmul %34, %88, %cst_55 {dimension_numbers = #tpu.dot_dimension_numbers<[1], [0], [0], [1], [0, 0, 1, 1], [], []>} : vector<8x32xbf16>, vector<32x8xbf16>, vector<8x8xf32> -> vector<8x8xf32>
    %c1_56 = arith.constant 1 : index
    %c0_57 = arith.constant 0 : index
    %c0_58 = arith.constant 0 : index
    %90 = vector.load %arg8[%c1_56, %c0_57, %c0_58] : memref<4x1x8xf32, #tpu.memory_space<vmem>>, vector<1x1x8xf32>
    %91 = vector.shape_cast %90 : vector<1x1x8xf32> to vector<1x8xf32>
    %92 = vector.broadcast %91 : vector<1x8xf32> to vector<8x8xf32>
    %93 = arith.addf %89, %92 : vector<8x8xf32>
    %c1_59 = arith.constant 1 : index
    %c0_60 = arith.constant 0 : index
    %c0_61 = arith.constant 0 : index
    %94 = vector.load %arg9[%c1_59, %c0_60, %c0_61] : memref<4x32x8xbf16, #tpu.memory_space<vmem>>, vector<1x32x8xbf16>
    %95 = vector.shape_cast %94 : vector<1x32x8xbf16> to vector<32x8xbf16>
    %cst_62 = arith.constant dense<0.000000e+00> : vector<8x8xf32>
    %96 = tpu.matmul %34, %95, %cst_62 {dimension_numbers = #tpu.dot_dimension_numbers<[1], [0], [0], [1], [0, 0, 1, 1], [], []>} : vector<8x32xbf16>, vector<32x8xbf16>, vector<8x8xf32> -> vector<8x8xf32>
    %c1_63 = arith.constant 1 : index
    %c0_64 = arith.constant 0 : index
    %c0_65 = arith.constant 0 : index
    %97 = vector.load %arg10[%c1_63, %c0_64, %c0_65] : memref<4x1x8xf32, #tpu.memory_space<vmem>>, vector<1x1x8xf32>
    %98 = vector.shape_cast %97 : vector<1x1x8xf32> to vector<1x8xf32>
    %99 = vector.broadcast %98 : vector<1x8xf32> to vector<8x8xf32>
    %100 = arith.addf %96, %99 : vector<8x8xf32>
    %101 = arith.truncf %86 : vector<8x8xf32> to vector<8x8xbf16>
    %102 = arith.truncf %93 : vector<8x8xf32> to vector<8x8xbf16>
    %cst_66 = arith.constant dense<0.000000e+00> : vector<8x8xf32>
    %103 = tpu.matmul %101, %102, %cst_66 {dimension_numbers = #tpu.dot_dimension_numbers<[1], [1], [0], [0], [0, 0, 1, 0], [], []>} : vector<8x8xbf16>, vector<8x8xbf16>, vector<8x8xf32> -> vector<8x8xf32>
    %104 = vector.broadcast %9 : vector<1x8xf32> to vector<8x8xf32>
    %105 = arith.addf %103, %104 : vector<8x8xf32>
    %cst_67 = arith.constant dense<0xFF800000> : vector<8xf32>
    %106 = vector.multi_reduction <maximumf>, %105, %cst_67 [1] : vector<8x8xf32> to vector<8xf32>
    %107 = vector.shape_cast %106 : vector<8xf32> to vector<8x1xf32>
    %108 = vector.broadcast %107 : vector<8x1xf32> to vector<8x8xf32>
    %109 = arith.subf %105, %108 : vector<8x8xf32>
    %110 = math.exp %109 : vector<8x8xf32>
    %cst_68 = arith.constant dense<0.000000e+00> : vector<8xf32>
    %111 = vector.multi_reduction <add>, %110, %cst_68 [1] : vector<8x8xf32> to vector<8xf32>
    %112 = vector.shape_cast %111 : vector<8xf32> to vector<8x1xf32>
    %113 = tpu.reciprocal %112 {approx = true} : vector<8x1xf32> -> vector<8x1xf32>
    %114 = vector.broadcast %113 : vector<8x1xf32> to vector<8x8xf32>
    %115 = arith.mulf %110, %114 : vector<8x8xf32>
    %116 = arith.truncf %115 : vector<8x8xf32> to vector<8x8xbf16>
    %117 = arith.truncf %100 : vector<8x8xf32> to vector<8x8xbf16>
    %cst_69 = arith.constant dense<0.000000e+00> : vector<8x8xf32>
    %118 = tpu.matmul %116, %117, %cst_69 {dimension_numbers = #tpu.dot_dimension_numbers<[1], [0], [0], [1], [0, 0, 1, 1], [], []>} : vector<8x8xbf16>, vector<8x8xbf16>, vector<8x8xf32> -> vector<8x8xf32>
    %119 = arith.truncf %118 : vector<8x8xf32> to vector<8x8xbf16>
    %c1_70 = arith.constant 1 : index
    %c0_71 = arith.constant 0 : index
    %c0_72 = arith.constant 0 : index
    %120 = vector.load %arg11[%c1_70, %c0_71, %c0_72] : memref<4x8x32xbf16, #tpu.memory_space<vmem>>, vector<1x8x32xbf16>
    %121 = vector.shape_cast %120 : vector<1x8x32xbf16> to vector<8x32xbf16>
    %cst_73 = arith.constant dense<0.000000e+00> : vector<8x32xf32>
    %122 = tpu.matmul %119, %121, %cst_73 {dimension_numbers = #tpu.dot_dimension_numbers<[1], [0], [0], [1], [0, 0, 1, 1], [], []>} : vector<8x8xbf16>, vector<8x32xbf16>, vector<8x32xf32> -> vector<8x32xf32>
    %123 = arith.addf %79, %122 : vector<8x32xf32>
    %c2 = arith.constant 2 : index
    %c0_74 = arith.constant 0 : index
    %c0_75 = arith.constant 0 : index
    %124 = vector.load %arg5[%c2, %c0_74, %c0_75] : memref<4x32x8xbf16, #tpu.memory_space<vmem>>, vector<1x32x8xbf16>
    %125 = vector.shape_cast %124 : vector<1x32x8xbf16> to vector<32x8xbf16>
    %cst_76 = arith.constant dense<0.000000e+00> : vector<8x8xf32>
    %126 = tpu.matmul %34, %125, %cst_76 {dimension_numbers = #tpu.dot_dimension_numbers<[1], [0], [0], [1], [0, 0, 1, 1], [], []>} : vector<8x32xbf16>, vector<32x8xbf16>, vector<8x8xf32> -> vector<8x8xf32>
    %c2_77 = arith.constant 2 : index
    %c0_78 = arith.constant 0 : index
    %c0_79 = arith.constant 0 : index
    %127 = vector.load %arg6[%c2_77, %c0_78, %c0_79] : memref<4x1x8xf32, #tpu.memory_space<vmem>>, vector<1x1x8xf32>
    %128 = vector.shape_cast %127 : vector<1x1x8xf32> to vector<1x8xf32>
    %129 = vector.broadcast %128 : vector<1x8xf32> to vector<8x8xf32>
    %130 = arith.addf %126, %129 : vector<8x8xf32>
    %c2_80 = arith.constant 2 : index
    %c0_81 = arith.constant 0 : index
    %c0_82 = arith.constant 0 : index
    %131 = vector.load %arg7[%c2_80, %c0_81, %c0_82] : memref<4x32x8xbf16, #tpu.memory_space<vmem>>, vector<1x32x8xbf16>
    %132 = vector.shape_cast %131 : vector<1x32x8xbf16> to vector<32x8xbf16>
    %cst_83 = arith.constant dense<0.000000e+00> : vector<8x8xf32>
    %133 = tpu.matmul %34, %132, %cst_83 {dimension_numbers = #tpu.dot_dimension_numbers<[1], [0], [0], [1], [0, 0, 1, 1], [], []>} : vector<8x32xbf16>, vector<32x8xbf16>, vector<8x8xf32> -> vector<8x8xf32>
    %c2_84 = arith.constant 2 : index
    %c0_85 = arith.constant 0 : index
    %c0_86 = arith.constant 0 : index
    %134 = vector.load %arg8[%c2_84, %c0_85, %c0_86] : memref<4x1x8xf32, #tpu.memory_space<vmem>>, vector<1x1x8xf32>
    %135 = vector.shape_cast %134 : vector<1x1x8xf32> to vector<1x8xf32>
    %136 = vector.broadcast %135 : vector<1x8xf32> to vector<8x8xf32>
    %137 = arith.addf %133, %136 : vector<8x8xf32>
    %c2_87 = arith.constant 2 : index
    %c0_88 = arith.constant 0 : index
    %c0_89 = arith.constant 0 : index
    %138 = vector.load %arg9[%c2_87, %c0_88, %c0_89] : memref<4x32x8xbf16, #tpu.memory_space<vmem>>, vector<1x32x8xbf16>
    %139 = vector.shape_cast %138 : vector<1x32x8xbf16> to vector<32x8xbf16>
    %cst_90 = arith.constant dense<0.000000e+00> : vector<8x8xf32>
    %140 = tpu.matmul %34, %139, %cst_90 {dimension_numbers = #tpu.dot_dimension_numbers<[1], [0], [0], [1], [0, 0, 1, 1], [], []>} : vector<8x32xbf16>, vector<32x8xbf16>, vector<8x8xf32> -> vector<8x8xf32>
    %c2_91 = arith.constant 2 : index
    %c0_92 = arith.constant 0 : index
    %c0_93 = arith.constant 0 : index
    %141 = vector.load %arg10[%c2_91, %c0_92, %c0_93] : memref<4x1x8xf32, #tpu.memory_space<vmem>>, vector<1x1x8xf32>
    %142 = vector.shape_cast %141 : vector<1x1x8xf32> to vector<1x8xf32>
    %143 = vector.broadcast %142 : vector<1x8xf32> to vector<8x8xf32>
    %144 = arith.addf %140, %143 : vector<8x8xf32>
    %145 = arith.truncf %130 : vector<8x8xf32> to vector<8x8xbf16>
    %146 = arith.truncf %137 : vector<8x8xf32> to vector<8x8xbf16>
    %cst_94 = arith.constant dense<0.000000e+00> : vector<8x8xf32>
    %147 = tpu.matmul %145, %146, %cst_94 {dimension_numbers = #tpu.dot_dimension_numbers<[1], [1], [0], [0], [0, 0, 1, 0], [], []>} : vector<8x8xbf16>, vector<8x8xbf16>, vector<8x8xf32> -> vector<8x8xf32>
    %148 = vector.broadcast %9 : vector<1x8xf32> to vector<8x8xf32>
    %149 = arith.addf %147, %148 : vector<8x8xf32>
    %cst_95 = arith.constant dense<0xFF800000> : vector<8xf32>
    %150 = vector.multi_reduction <maximumf>, %149, %cst_95 [1] : vector<8x8xf32> to vector<8xf32>
    %151 = vector.shape_cast %150 : vector<8xf32> to vector<8x1xf32>
    %152 = vector.broadcast %151 : vector<8x1xf32> to vector<8x8xf32>
    %153 = arith.subf %149, %152 : vector<8x8xf32>
    %154 = math.exp %153 : vector<8x8xf32>
    %cst_96 = arith.constant dense<0.000000e+00> : vector<8xf32>
    %155 = vector.multi_reduction <add>, %154, %cst_96 [1] : vector<8x8xf32> to vector<8xf32>
    %156 = vector.shape_cast %155 : vector<8xf32> to vector<8x1xf32>
    %157 = tpu.reciprocal %156 {approx = true} : vector<8x1xf32> -> vector<8x1xf32>
    %158 = vector.broadcast %157 : vector<8x1xf32> to vector<8x8xf32>
    %159 = arith.mulf %154, %158 : vector<8x8xf32>
    %160 = arith.truncf %159 : vector<8x8xf32> to vector<8x8xbf16>
    %161 = arith.truncf %144 : vector<8x8xf32> to vector<8x8xbf16>
    %cst_97 = arith.constant dense<0.000000e+00> : vector<8x8xf32>
    %162 = tpu.matmul %160, %161, %cst_97 {dimension_numbers = #tpu.dot_dimension_numbers<[1], [0], [0], [1], [0, 0, 1, 1], [], []>} : vector<8x8xbf16>, vector<8x8xbf16>, vector<8x8xf32> -> vector<8x8xf32>
    %163 = arith.truncf %162 : vector<8x8xf32> to vector<8x8xbf16>
    %c2_98 = arith.constant 2 : index
    %c0_99 = arith.constant 0 : index
    %c0_100 = arith.constant 0 : index
    %164 = vector.load %arg11[%c2_98, %c0_99, %c0_100] : memref<4x8x32xbf16, #tpu.memory_space<vmem>>, vector<1x8x32xbf16>
    %165 = vector.shape_cast %164 : vector<1x8x32xbf16> to vector<8x32xbf16>
    %cst_101 = arith.constant dense<0.000000e+00> : vector<8x32xf32>
    %166 = tpu.matmul %163, %165, %cst_101 {dimension_numbers = #tpu.dot_dimension_numbers<[1], [0], [0], [1], [0, 0, 1, 1], [], []>} : vector<8x8xbf16>, vector<8x32xbf16>, vector<8x32xf32> -> vector<8x32xf32>
    %167 = arith.addf %123, %166 : vector<8x32xf32>
    %c3 = arith.constant 3 : index
    %c0_102 = arith.constant 0 : index
    %c0_103 = arith.constant 0 : index
    %168 = vector.load %arg5[%c3, %c0_102, %c0_103] : memref<4x32x8xbf16, #tpu.memory_space<vmem>>, vector<1x32x8xbf16>
    %169 = vector.shape_cast %168 : vector<1x32x8xbf16> to vector<32x8xbf16>
    %cst_104 = arith.constant dense<0.000000e+00> : vector<8x8xf32>
    %170 = tpu.matmul %34, %169, %cst_104 {dimension_numbers = #tpu.dot_dimension_numbers<[1], [0], [0], [1], [0, 0, 1, 1], [], []>} : vector<8x32xbf16>, vector<32x8xbf16>, vector<8x8xf32> -> vector<8x8xf32>
    %c3_105 = arith.constant 3 : index
    %c0_106 = arith.constant 0 : index
    %c0_107 = arith.constant 0 : index
    %171 = vector.load %arg6[%c3_105, %c0_106, %c0_107] : memref<4x1x8xf32, #tpu.memory_space<vmem>>, vector<1x1x8xf32>
    %172 = vector.shape_cast %171 : vector<1x1x8xf32> to vector<1x8xf32>
    %173 = vector.broadcast %172 : vector<1x8xf32> to vector<8x8xf32>
    %174 = arith.addf %170, %173 : vector<8x8xf32>
    %c3_108 = arith.constant 3 : index
    %c0_109 = arith.constant 0 : index
    %c0_110 = arith.constant 0 : index
    %175 = vector.load %arg7[%c3_108, %c0_109, %c0_110] : memref<4x32x8xbf16, #tpu.memory_space<vmem>>, vector<1x32x8xbf16>
    %176 = vector.shape_cast %175 : vector<1x32x8xbf16> to vector<32x8xbf16>
    %cst_111 = arith.constant dense<0.000000e+00> : vector<8x8xf32>
    %177 = tpu.matmul %34, %176, %cst_111 {dimension_numbers = #tpu.dot_dimension_numbers<[1], [0], [0], [1], [0, 0, 1, 1], [], []>} : vector<8x32xbf16>, vector<32x8xbf16>, vector<8x8xf32> -> vector<8x8xf32>
    %c3_112 = arith.constant 3 : index
    %c0_113 = arith.constant 0 : index
    %c0_114 = arith.constant 0 : index
    %178 = vector.load %arg8[%c3_112, %c0_113, %c0_114] : memref<4x1x8xf32, #tpu.memory_space<vmem>>, vector<1x1x8xf32>
    %179 = vector.shape_cast %178 : vector<1x1x8xf32> to vector<1x8xf32>
    %180 = vector.broadcast %179 : vector<1x8xf32> to vector<8x8xf32>
    %181 = arith.addf %177, %180 : vector<8x8xf32>
    %c3_115 = arith.constant 3 : index
    %c0_116 = arith.constant 0 : index
    %c0_117 = arith.constant 0 : index
    %182 = vector.load %arg9[%c3_115, %c0_116, %c0_117] : memref<4x32x8xbf16, #tpu.memory_space<vmem>>, vector<1x32x8xbf16>
    %183 = vector.shape_cast %182 : vector<1x32x8xbf16> to vector<32x8xbf16>
    %cst_118 = arith.constant dense<0.000000e+00> : vector<8x8xf32>
    %184 = tpu.matmul %34, %183, %cst_118 {dimension_numbers = #tpu.dot_dimension_numbers<[1], [0], [0], [1], [0, 0, 1, 1], [], []>} : vector<8x32xbf16>, vector<32x8xbf16>, vector<8x8xf32> -> vector<8x8xf32>
    %c3_119 = arith.constant 3 : index
    %c0_120 = arith.constant 0 : index
    %c0_121 = arith.constant 0 : index
    %185 = vector.load %arg10[%c3_119, %c0_120, %c0_121] : memref<4x1x8xf32, #tpu.memory_space<vmem>>, vector<1x1x8xf32>
    %186 = vector.shape_cast %185 : vector<1x1x8xf32> to vector<1x8xf32>
    %187 = vector.broadcast %186 : vector<1x8xf32> to vector<8x8xf32>
    %188 = arith.addf %184, %187 : vector<8x8xf32>
    %189 = arith.truncf %174 : vector<8x8xf32> to vector<8x8xbf16>
    %190 = arith.truncf %181 : vector<8x8xf32> to vector<8x8xbf16>
    %cst_122 = arith.constant dense<0.000000e+00> : vector<8x8xf32>
    %191 = tpu.matmul %189, %190, %cst_122 {dimension_numbers = #tpu.dot_dimension_numbers<[1], [1], [0], [0], [0, 0, 1, 0], [], []>} : vector<8x8xbf16>, vector<8x8xbf16>, vector<8x8xf32> -> vector<8x8xf32>
    %192 = vector.broadcast %9 : vector<1x8xf32> to vector<8x8xf32>
    %193 = arith.addf %191, %192 : vector<8x8xf32>
    %cst_123 = arith.constant dense<0xFF800000> : vector<8xf32>
    %194 = vector.multi_reduction <maximumf>, %193, %cst_123 [1] : vector<8x8xf32> to vector<8xf32>
    %195 = vector.shape_cast %194 : vector<8xf32> to vector<8x1xf32>
    %196 = vector.broadcast %195 : vector<8x1xf32> to vector<8x8xf32>
    %197 = arith.subf %193, %196 : vector<8x8xf32>
    %198 = math.exp %197 : vector<8x8xf32>
    %cst_124 = arith.constant dense<0.000000e+00> : vector<8xf32>
    %199 = vector.multi_reduction <add>, %198, %cst_124 [1] : vector<8x8xf32> to vector<8xf32>
    %200 = vector.shape_cast %199 : vector<8xf32> to vector<8x1xf32>
    %201 = tpu.reciprocal %200 {approx = true} : vector<8x1xf32> -> vector<8x1xf32>
    %202 = vector.broadcast %201 : vector<8x1xf32> to vector<8x8xf32>
    %203 = arith.mulf %198, %202 : vector<8x8xf32>
    %204 = arith.truncf %203 : vector<8x8xf32> to vector<8x8xbf16>
    %205 = arith.truncf %188 : vector<8x8xf32> to vector<8x8xbf16>
    %cst_125 = arith.constant dense<0.000000e+00> : vector<8x8xf32>
    %206 = tpu.matmul %204, %205, %cst_125 {dimension_numbers = #tpu.dot_dimension_numbers<[1], [0], [0], [1], [0, 0, 1, 1], [], []>} : vector<8x8xbf16>, vector<8x8xbf16>, vector<8x8xf32> -> vector<8x8xf32>
    %207 = arith.truncf %206 : vector<8x8xf32> to vector<8x8xbf16>
    %c3_126 = arith.constant 3 : index
    %c0_127 = arith.constant 0 : index
    %c0_128 = arith.constant 0 : index
    %208 = vector.load %arg11[%c3_126, %c0_127, %c0_128] : memref<4x8x32xbf16, #tpu.memory_space<vmem>>, vector<1x8x32xbf16>
    %209 = vector.shape_cast %208 : vector<1x8x32xbf16> to vector<8x32xbf16>
    %cst_129 = arith.constant dense<0.000000e+00> : vector<8x32xf32>
    %210 = tpu.matmul %207, %209, %cst_129 {dimension_numbers = #tpu.dot_dimension_numbers<[1], [0], [0], [1], [0, 0, 1, 1], [], []>} : vector<8x8xbf16>, vector<8x32xbf16>, vector<8x32xf32> -> vector<8x32xf32>
    %211 = arith.addf %167, %210 : vector<8x32xf32>
    %c0_130 = arith.constant 0 : index
    %c0_131 = arith.constant 0 : index
    %212 = vector.load %arg12[%c0_130, %c0_131] : memref<1x32xf32, #tpu.memory_space<vmem>>, vector<1x32xf32>
    %213 = vector.broadcast %212 : vector<1x32xf32> to vector<8x32xf32>
    %214 = arith.addf %211, %213 : vector<8x32xf32>
    %215 = arith.addf %2, %214 : vector<8x32xf32>
    %c0_132 = arith.constant 0 : index
    %c0_133 = arith.constant 0 : index
    %216 = vector.load %arg13[%c0_132, %c0_133] : memref<1x32xf32, #tpu.memory_space<vmem>>, vector<1x32xf32>
    %c0_134 = arith.constant 0 : index
    %c0_135 = arith.constant 0 : index
    %217 = vector.load %arg14[%c0_134, %c0_135] : memref<1x32xf32, #tpu.memory_space<vmem>>, vector<1x32xf32>
    %cst_136 = arith.constant dense<0.000000e+00> : vector<8xf32>
    %218 = vector.multi_reduction <add>, %215, %cst_136 [1] : vector<8x32xf32> to vector<8xf32>
    %219 = vector.shape_cast %218 : vector<8xf32> to vector<8x1xf32>
    %cst_137 = arith.constant 3.200000e+01 : f32
    %220 = vector.broadcast %cst_137 : f32 to vector<8x1xf32>
    %221 = arith.divf %219, %220 : vector<8x1xf32>
    %222 = vector.broadcast %221 : vector<8x1xf32> to vector<8x32xf32>
    %223 = arith.subf %215, %222 : vector<8x32xf32>
    %224 = arith.mulf %223, %223 : vector<8x32xf32>
    %cst_138 = arith.constant dense<0.000000e+00> : vector<8xf32>
    %225 = vector.multi_reduction <add>, %224, %cst_138 [1] : vector<8x32xf32> to vector<8xf32>
    %226 = vector.shape_cast %225 : vector<8xf32> to vector<8x1xf32>
    %cst_139 = arith.constant 3.200000e+01 : f32
    %227 = vector.broadcast %cst_139 : f32 to vector<8x1xf32>
    %228 = arith.divf %226, %227 : vector<8x1xf32>
    %229 = vector.broadcast %221 : vector<8x1xf32> to vector<8x32xf32>
    %230 = arith.subf %215, %229 : vector<8x32xf32>
    %cst_140 = arith.constant 9.99999974E-6 : f32
    %231 = vector.broadcast %cst_140 : f32 to vector<8x1xf32>
    %232 = arith.addf %228, %231 : vector<8x1xf32>
    %233 = math.rsqrt %232 : vector<8x1xf32>
    %234 = vector.broadcast %233 : vector<8x1xf32> to vector<8x32xf32>
    %235 = arith.mulf %230, %234 : vector<8x32xf32>
    %236 = vector.broadcast %216 : vector<1x32xf32> to vector<8x32xf32>
    %237 = arith.mulf %235, %236 : vector<8x32xf32>
    %238 = vector.broadcast %217 : vector<1x32xf32> to vector<8x32xf32>
    %239 = arith.addf %237, %238 : vector<8x32xf32>
    %240 = arith.truncf %239 : vector<8x32xf32> to vector<8x32xbf16>
    %c0_141 = arith.constant 0 : index
    %c0_142 = arith.constant 0 : index
    %241 = vector.load %arg15[%c0_141, %c0_142] : memref<32x64xbf16, #tpu.memory_space<vmem>>, vector<32x64xbf16>
    %cst_143 = arith.constant dense<0.000000e+00> : vector<8x64xf32>
    %242 = tpu.matmul %240, %241, %cst_143 {dimension_numbers = #tpu.dot_dimension_numbers<[1], [0], [0], [1], [0, 0, 1, 1], [], []>} : vector<8x32xbf16>, vector<32x64xbf16>, vector<8x64xf32> -> vector<8x64xf32>
    %c0_144 = arith.constant 0 : index
    %c0_145 = arith.constant 0 : index
    %243 = vector.load %arg16[%c0_144, %c0_145] : memref<1x64xf32, #tpu.memory_space<vmem>>, vector<1x64xf32>
    %244 = vector.broadcast %243 : vector<1x64xf32> to vector<8x64xf32>
    %245 = arith.addf %242, %244 : vector<8x64xf32>
    %cst_146 = arith.constant 0.000000e+00 : f32
    %246 = vector.broadcast %cst_146 : f32 to vector<8x64xf32>
    %247 = arith.maximumf %245, %246 : vector<8x64xf32>
    %248 = arith.truncf %247 : vector<8x64xf32> to vector<8x64xbf16>
    %c0_147 = arith.constant 0 : index
    %c0_148 = arith.constant 0 : index
    %249 = vector.load %arg17[%c0_147, %c0_148] : memref<64x32xbf16, #tpu.memory_space<vmem>>, vector<64x32xbf16>
    %cst_149 = arith.constant dense<0.000000e+00> : vector<8x32xf32>
    %250 = tpu.matmul %248, %249, %cst_149 {dimension_numbers = #tpu.dot_dimension_numbers<[1], [0], [0], [1], [0, 0, 1, 1], [], []>} : vector<8x64xbf16>, vector<64x32xbf16>, vector<8x32xf32> -> vector<8x32xf32>
    %c0_150 = arith.constant 0 : index
    %c0_151 = arith.constant 0 : index
    %251 = vector.load %arg18[%c0_150, %c0_151] : memref<1x32xf32, #tpu.memory_space<vmem>>, vector<1x32xf32>
    %252 = vector.broadcast %251 : vector<1x32xf32> to vector<8x32xf32>
    %253 = arith.addf %250, %252 : vector<8x32xf32>
    %254 = arith.addf %215, %253 : vector<8x32xf32>
    %255 = arith.truncf %254 : vector<8x32xf32> to vector<8x32xbf16>
    %c0_152 = arith.constant 0 : index
    %c0_153 = arith.constant 0 : index
    %c0_154 = arith.constant 0 : index
    %256 = vector.load %arg19[%c0_152, %c0_153, %c0_154] : memref<1x8x32xbf16, #tpu.memory_space<vmem>>, vector<1x8x32xbf16>
    %257 = vector.shape_cast %256 : vector<1x8x32xbf16> to vector<8x32xbf16>
    %258 = vector.shape_cast %255 : vector<8x32xbf16> to vector<1x8x32xbf16>
    tpu.vector_store %arg19[%c0_152, %c0_153, %c0_154], %258 {strides = array<i32>} : memref<1x8x32xbf16, #tpu.memory_space<vmem>>, vector<1x8x32xbf16>,
    return
  }
  func.func @transform_0(%arg0: i32) -> (i32, i32, i32) {
    %c0_i32 = arith.constant 0 : i32
    %c0_i32_0 = arith.constant 0 : i32
    %c0_i32_1 = arith.constant 0 : i32
    return %arg0, %c0_i32, %c0_i32_0 : i32, i32, i32
  }
  func.func @transform_1(%arg0: i32) -> (i32, i32, i32) {
    %c0_i32 = arith.constant 0 : i32
    %c0_i32_0 = arith.constant 0 : i32
    %c0_i32_1 = arith.constant 0 : i32
    return %arg0, %c0_i32, %c0_i32_0 : i32, i32, i32
  }
  func.func @transform_2(%arg0: i32) -> (i32, i32) {
    %c0_i32 = arith.constant 0 : i32
    %c0_i32_0 = arith.constant 0 : i32
    %c0_i32_1 = arith.constant 0 : i32
    return %c0_i32, %c0_i32_0 : i32, i32
  }
  func.func @transform_3(%arg0: i32) -> (i32, i32) {
    %c0_i32 = arith.constant 0 : i32
    %c0_i32_0 = arith.constant 0 : i32
    %c0_i32_1 = arith.constant 0 : i32
    return %c0_i32, %c0_i32_0 : i32, i32
  }
  func.func @transform_4(%arg0: i32) -> (i32, i32, i32) {
    %c0_i32 = arith.constant 0 : i32
    %c0_i32_0 = arith.constant 0 : i32
    %c0_i32_1 = arith.constant 0 : i32
    %c0_i32_2 = arith.constant 0 : i32
    return %c0_i32, %c0_i32_0, %c0_i32_1 : i32, i32, i32
  }
  func.func @transform_5(%arg0: i32) -> (i32, i32, i32) {
    %c0_i32 = arith.constant 0 : i32
    %c0_i32_0 = arith.constant 0 : i32
    %c0_i32_1 = arith.constant 0 : i32
    %c0_i32_2 = arith.constant 0 : i32
    return %c0_i32, %c0_i32_0, %c0_i32_1 : i32, i32, i32
  }
  func.func @transform_6(%arg0: i32) -> (i32, i32, i32) {
    %c0_i32 = arith.constant 0 : i32
    %c0_i32_0 = arith.constant 0 : i32
    %c0_i32_1 = arith.constant 0 : i32
    %c0_i32_2 = arith.constant 0 : i32
    return %c0_i32, %c0_i32_0, %c0_i32_1 : i32, i32, i32
  }
  func.func @transform_7(%arg0: i32) -> (i32, i32, i32) {
    %c0_i32 = arith.constant 0 : i32
    %c0_i32_0 = arith.constant 0 : i32
    %c0_i32_1 = arith.constant 0 : i32
    %c0_i32_2 = arith.constant 0 : i32
    return %c0_i32, %c0_i32_0, %c0_i32_1 : i32, i32, i32
  }
  func.func @transform_8(%arg0: i32) -> (i32, i32, i32) {
    %c0_i32 = arith.constant 0 : i32
    %c0_i32_0 = arith.constant 0 : i32
    %c0_i32_1 = arith.constant 0 : i32
    %c0_i32_2 = arith.constant 0 : i32
    return %c0_i32, %c0_i32_0, %c0_i32_1 : i32, i32, i32
  }
  func.func @transform_9(%arg0: i32) -> (i32, i32, i32) {
    %c0_i32 = arith.constant 0 : i32
    %c0_i32_0 = arith.constant 0 : i32
    %c0_i32_1 = arith.constant 0 : i32
    %c0_i32_2 = arith.constant 0 : i32
    return %c0_i32, %c0_i32_0, %c0_i32_1 : i32, i32, i32
  }
  func.func @transform_10(%arg0: i32) -> (i32, i32, i32) {
    %c0_i32 = arith.constant 0 : i32
    %c0_i32_0 = arith.constant 0 : i32
    %c0_i32_1 = arith.constant 0 : i32
    %c0_i32_2 = arith.constant 0 : i32
    return %c0_i32, %c0_i32_0, %c0_i32_1 : i32, i32, i32
  }
  func.func @transform_11(%arg0: i32) -> (i32, i32) {
    %c0_i32 = arith.constant 0 : i32
    %c0_i32_0 = arith.constant 0 : i32
    %c0_i32_1 = arith.constant 0 : i32
    return %c0_i32, %c0_i32_0 : i32, i32
  }
  func.func @transform_12(%arg0: i32) -> (i32, i32) {
    %c0_i32 = arith.constant 0 : i32
    %c0_i32_0 = arith.constant 0 : i32
    %c0_i32_1 = arith.constant 0 : i32
    return %c0_i32, %c0_i32_0 : i32, i32
  }
  func.func @transform_13(%arg0: i32) -> (i32, i32) {
    %c0_i32 = arith.constant 0 : i32
    %c0_i32_0 = arith.constant 0 : i32
    %c0_i32_1 = arith.constant 0 : i32
    return %c0_i32, %c0_i32_0 : i32, i32
  }
  func.func @transform_14(%arg0: i32) -> (i32, i32) {
    %c0_i32 = arith.constant 0 : i32
    %c0_i32_0 = arith.constant 0 : i32
    %c0_i32_1 = arith.constant 0 : i32
    return %c0_i32, %c0_i32_0 : i32, i32
  }
  func.func @transform_15(%arg0: i32) -> (i32, i32) {
    %c0_i32 = arith.constant 0 : i32
    %c0_i32_0 = arith.constant 0 : i32
    %c0_i32_1 = arith.constant 0 : i32
    return %c0_i32, %c0_i32_0 : i32, i32
  }
  func.func @transform_16(%arg0: i32) -> (i32, i32) {
    %c0_i32 = arith.constant 0 : i32
    %c0_i32_0 = arith.constant 0 : i32
    %c0_i32_1 = arith.constant 0 : i32
    return %c0_i32, %c0_i32_0 : i32, i32
  }
  func.func @transform_17(%arg0: i32) -> (i32, i32) {
    %c0_i32 = arith.constant 0 : i32
    %c0_i32_0 = arith.constant 0 : i32
    %c0_i32_1 = arith.constant 0 : i32
    return %c0_i32, %c0_i32_0 : i32, i32
  }
  func.func @transform_18(%arg0: i32) -> (i32, i32, i32) {
    %c0_i32 = arith.constant 0 : i32
    %c0_i32_0 = arith.constant 0 : i32
    %c0_i32_1 = arith.constant 0 : i32
    return %arg0, %c0_i32, %c0_i32_0 : i32, i32, i32
  }
}

</mosaic_0001>

<llo_original>
// kernel: tpu_custom_call.1
$region0: #{tpu_custom_call.1}
  #allocation0 [shape = 'u32[]', space=smem, size = 0x4, offset = 0x4, fixed_abs, tag = 'smem constant byte address 0x4 - core index']
  #allocation1 [shape = 'u32[72,128]{1,0:T(1,128)}', space=vmem, size = 0x9000, scoped, tag = 'internal scratch']
  %s0 = inlined_call_operand.vmem [shape: bf16[2,8,32], index: 0, kind: input, shape index: {}]
  %s1 = inlined_call_operand.vmem [shape: f32[2,1,8], index: 1, kind: input, shape index: {}]
  %s2 = inlined_call_operand.vmem [shape: f32[1,32], index: 2, kind: input, shape index: {}]
  %s3 = inlined_call_operand.vmem [shape: f32[1,32], index: 3, kind: input, shape index: {}]
  %s4 = inlined_call_operand.vmem [shape: bf16[4,32,8], index: 4, kind: input, shape index: {}]
  %s5 = inlined_call_operand.vmem [shape: f32[4,1,8], index: 5, kind: input, shape index: {}]
  %s6 = inlined_call_operand.vmem [shape: bf16[4,32,8], index: 6, kind: input, shape index: {}]
  %s7 = inlined_call_operand.vmem [shape: f32[4,1,8], index: 7, kind: input, shape index: {}]
  %s8 = inlined_call_operand.vmem [shape: bf16[4,32,8], index: 8, kind: input, shape index: {}]
  %s9 = inlined_call_operand.vmem [shape: f32[4,1,8], index: 9, kind: input, shape index: {}]
  %s10 = inlined_call_operand.vmem [shape: bf16[4,8,32], index: 10, kind: input, shape index: {}]
  %s11 = inlined_call_operand.vmem [shape: f32[1,32], index: 11, kind: input, shape index: {}]
  %s12 = inlined_call_operand.vmem [shape: f32[1,32], index: 12, kind: input, shape index: {}]
  %s13 = inlined_call_operand.vmem [shape: f32[1,32], index: 13, kind: input, shape index: {}]
  %s14 = inlined_call_operand.vmem [shape: bf16[32,64], index: 14, kind: input, shape index: {}]
  %s15 = inlined_call_operand.vmem [shape: f32[1,64], index: 15, kind: input, shape index: {}]
  %s16 = inlined_call_operand.vmem [shape: bf16[64,32], index: 16, kind: input, shape index: {}]
  %s17 = inlined_call_operand.vmem [shape: f32[1,32], index: 17, kind: input, shape index: {}]
  %s18 = inlined_call_operand.hbm [shape: bf16[2,8,32], index: 18, kind: output, shape index: {}]
  %s19 = sld [smem:[#allocation0]]
  $region105: #{tpu_custom_call.1} parent=0
    _
  %s21 = ssub.s32 1, %s19
  %s22 = scalar_select 0, %s21, %s19
  $region1: #{tpu_custom_call.1} parent=0
    #allocation2 [shape = 'u8[4096]{0}', space=vmem, size = 0x1000, scoped, tag = 'output window, operand 0']
    #allocation3 [shape = 's32[2]{0}', space=sflag, size = 0x8, scoped, tag = 'scoped memory for tpu_custom_call.1']
    %23 = vsyncpa [#allocation3], 0
    %s24 = scalar_lea.sflag [#allocation3], 1
    %25 = vsyncpa %s24, 0
    loop: start=0, step=1, limit=4
    $region2: #{tpu_custom_call.1} parent=1 // loop_pre_header
      _
    $region3: #{tpu_custom_call.1} parent=1 // loop_header
      %s27 = sphi 0, %s31
      %p28 = scmp.ge.s32.totalorder %s27, 4
      %s37 = sphi 0, %s39
      %s40 = sphi 0, %s37
      %s41 = sphi 0, %s40
      %s57 = sphi 0, %s41
      %s63 = sphi 0, %s65
      %s66 = sphi 0, %s63
      %s67 = sphi 0, %s66
      %s83 = sphi 0, %s67
      %s87 = sphi 0, %s87
      %s89 = sphi 0, %s87
      %s90 = sphi 0, %s89
      %s104 = sphi 0, %s90
      %s108 = sphi 0, %s108
      %s110 = sphi 0, %s108
      %s111 = sphi 0, %s110
      %s125 = sphi 0, %s111
      %s129 = sphi 0, %s129
      %s131 = sphi 0, %s129
      %s132 = sphi 0, %s131
      %s146 = sphi 0, %s132
      %s150 = sphi 0, %s150
      %s152 = sphi 0, %s150
      %s153 = sphi 0, %s152
      %s167 = sphi 0, %s153
      %s171 = sphi 0, %s171
      %s173 = sphi 0, %s171
      %s174 = sphi 0, %s173
      %s188 = sphi 0, %s174
      %s192 = sphi 0, %s192
      %s194 = sphi 0, %s192
      %s195 = sphi 0, %s194
      %s209 = sphi 0, %s195
      %s213 = sphi 0, %s213
      %s215 = sphi 0, %s213
      %s216 = sphi 0, %s215
      %s230 = sphi 0, %s216
      %s234 = sphi 0, %s234
      %s236 = sphi 0, %s234
      %s237 = sphi 0, %s236
      %s251 = sphi 0, %s237
      %s255 = sphi 0, %s255
      %s257 = sphi 0, %s255
      %s258 = sphi 0, %s257
      %s272 = sphi 0, %s258
      %s276 = sphi 0, %s276
      %s278 = sphi 0, %s276
      %s279 = sphi 0, %s278
      %s293 = sphi 0, %s279
      %s297 = sphi 0, %s297
      %s299 = sphi 0, %s297
      %s300 = sphi 0, %s299
      %s314 = sphi 0, %s300
      %s318 = sphi 0, %s318
      %s320 = sphi 0, %s318
      %s321 = sphi 0, %s320
      %s335 = sphi 0, %s321
      %s339 = sphi 0, %s339
      %s341 = sphi 0, %s339
      %s342 = sphi 0, %s341
      %s356 = sphi 0, %s342
      %s360 = sphi 0, %s360
      %s362 = sphi 0, %s360
      %s363 = sphi 0, %s362
      %s377 = sphi 0, %s363
      %s381 = sphi 0, %s381
      %s383 = sphi 0, %s381
      %s384 = sphi 0, %s383
      %s398 = sphi 0, %s384
      %s402 = sphi 0, %s402
      %s404 = sphi 0, %s402
      %s405 = sphi 0, %s404
      %s419 = sphi 0, %s405
      %s425 = sphi 0, %s427
      %s428 = sphi 0, %s425
      %s429 = sphi 0, %s428
      %s445 = sphi 0, %s429
    $region4: #{tpu_custom_call.1} parent=1 // loop_header_branch
      %30 = sbr.rel (%p28) target = $region8
    $region5: #{tpu_custom_call.1} parent=1 // loop_body
      %s32 = ssub.s32 %s27, 1
      %s33 = ssub.s32 %s27, 2
      %s34 = sadd.s32 %s27, 1
      %s35 = ssub.s32 %s27, %s34
      %p36 = scmp.eq.s32.totalorder %s35, 0
      %s38 = sadd.s32 %s37, 1
      %s39 = scalar_select %p36, %s37, %s38
      %p42 = pneg %p36
      %p43 = scmp.eq.s32.totalorder %s27, 1
      %p44 = por %p42, %p43
      %p45 = scmp.ne.s32.totalorder %s37, %s40
      %p46 = scmp.eq.s32.totalorder %s27, 0
      %p47 = por %p45, %p46
      %p48 = scmp.ne.s32.totalorder %s37, %s40
      %p49 = scmp.eq.s32.totalorder %s32, 1
      %p50 = por %p48, %p49
      %p51 = scmp.ne.s32.totalorder %s40, %s41
      %p52 = scmp.eq.s32.totalorder %s32, 0
      %p53 = por %p51, %p52
      %p54 = scmp.ne.s32.totalorder %s40, %s41
      %p55 = scmp.eq.s32.totalorder %s33, 1
      %p56 = por %p54, %p55
      %p58 = scmp.ne.s32.totalorder %s41, %s57
      %p59 = scmp.eq.s32.totalorder %s33, 0
      %p60 = por %p58, %p59
      %s61 = ssub.s32 %s27, %s34
      %p62 = scmp.eq.s32.totalorder %s61, 0
      %s64 = sadd.s32 %s63, 1
      %s65 = scalar_select %p62, %s63, %s64
      %p68 = pneg %p62
      %p69 = scmp.eq.s32.totalorder %s27, 1
      %p70 = por %p68, %p69
      %p71 = scmp.ne.s32.totalorder %s63, %s66
      %p72 = scmp.eq.s32.totalorder %s27, 0
      %p73 = por %p71, %p72
      %p74 = scmp.ne.s32.totalorder %s63, %s66
      %p75 = scmp.eq.s32.totalorder %s32, 1
      %p76 = por %p74, %p75
      %p77 = scmp.ne.s32.totalorder %s66, %s67
      %p78 = scmp.eq.s32.totalorder %s32, 0
      %p79 = por %p77, %p78
      %p80 = scmp.ne.s32.totalorder %s66, %s67
      %p81 = scmp.eq.s32.totalorder %s33, 1
      %p82 = por %p80, %p81
      %p84 = scmp.ne.s32.totalorder %s67, %s83
      %p85 = scmp.eq.s32.totalorder %s33, 0
      %p86 = por %p84, %p85
      %s88 = sadd.s32 %s87, 1
      %p91 = scmp.eq.s32.totalorder %s27, 1
      %p92 = scmp.ne.s32.totalorder %s87, %s89
      %p93 = scmp.eq.s32.totalorder %s27, 0
      %p94 = por %p92, %p93
      %p95 = scmp.ne.s32.totalorder %s87, %s89
      %p96 = scmp.eq.s32.totalorder %s32, 1
      %p97 = por %p95, %p96
      %p98 = scmp.ne.s32.totalorder %s89, %s90
      %p99 = scmp.eq.s32.totalorder %s32, 0
      %p100 = por %p98, %p99
      %p101 = scmp.ne.s32.totalorder %s89, %s90
      %p102 = scmp.eq.s32.totalorder %s33, 1
      %p103 = por %p101, %p102
      %p105 = scmp.ne.s32.totalorder %s90, %s104
      %p106 = scmp.eq.s32.totalorder %s33, 0
      %p107 = por %p105, %p106
      %s109 = sadd.s32 %s108, 1
      %p112 = scmp.eq.s32.totalorder %s27, 1
      %p113 = scmp.ne.s32.totalorder %s108, %s110
      %p114 = scmp.eq.s32.totalorder %s27, 0
      %p115 = por %p113, %p114
      %p116 = scmp.ne.s32.totalorder %s108, %s110
      %p117 = scmp.eq.s32.totalorder %s32, 1
      %p118 = por %p116, %p117
      %p119 = scmp.ne.s32.totalorder %s110, %s111
      %p120 = scmp.eq.s32.totalorder %s32, 0
      %p121 = por %p119, %p120
      %p122 = scmp.ne.s32.totalorder %s110, %s111
      %p123 = scmp.eq.s32.totalorder %s33, 1
      %p124 = por %p122, %p123
      %p126 = scmp.ne.s32.totalorder %s111, %s125
      %p127 = scmp.eq.s32.totalorder %s33, 0
      %p128 = por %p126, %p127
      %s130 = sadd.s32 %s129, 1
      %p133 = scmp.eq.s32.totalorder %s27, 1
      %p134 = scmp.ne.s32.totalorder %s129, %s131
      %p135 = scmp.eq.s32.totalorder %s27, 0
      %p136 = por %p134, %p135
      %p137 = scmp.ne.s32.totalorder %s129, %s131
      %p138 = scmp.eq.s32.totalorder %s32, 1
      %p139 = por %p137, %p138
      %p140 = scmp.ne.s32.totalorder %s131, %s132
      %p141 = scmp.eq.s32.totalorder %s32, 0
      %p142 = por %p140, %p141
      %p143 = scmp.ne.s32.totalorder %s131, %s132
      %p144 = scmp.eq.s32.totalorder %s33, 1
      %p145 = por %p143, %p144
      %p147 = scmp.ne.s32.totalorder %s132, %s146
      %p148 = scmp.eq.s32.totalorder %s33, 0
      %p149 = por %p147, %p148
      %s151 = sadd.s32 %s150, 1
      %p154 = scmp.eq.s32.totalorder %s27, 1
      %p155 = scmp.ne.s32.totalorder %s150, %s152
      %p156 = scmp.eq.s32.totalorder %s27, 0
      %p157 = por %p155, %p156
      %p158 = scmp.ne.s32.totalorder %s150, %s152
      %p159 = scmp.eq.s32.totalorder %s32, 1
      %p160 = por %p158, %p159
      %p161 = scmp.ne.s32.totalorder %s152, %s153
      %p162 = scmp.eq.s32.totalorder %s32, 0
      %p163 = por %p161, %p162
      %p164 = scmp.ne.s32.totalorder %s152, %s153
      %p165 = scmp.eq.s32.totalorder %s33, 1
      %p166 = por %p164, %p165
      %p168 = scmp.ne.s32.totalorder %s153, %s167
      %p169 = scmp.eq.s32.totalorder %s33, 0
      %p170 = por %p168, %p169
      %s172 = sadd.s32 %s171, 1
      %p175 = scmp.eq.s32.totalorder %s27, 1
      %p176 = scmp.ne.s32.totalorder %s171, %s173
      %p177 = scmp.eq.s32.totalorder %s27, 0
      %p178 = por %p176, %p177
      %p179 = scmp.ne.s32.totalorder %s171, %s173
      %p180 = scmp.eq.s32.totalorder %s32, 1
      %p181 = por %p179, %p180
      %p182 = scmp.ne.s32.totalorder %s173, %s174
      %p183 = scmp.eq.s32.totalorder %s32, 0
      %p184 = por %p182, %p183
      %p185 = scmp.ne.s32.totalorder %s173, %s174
      %p186 = scmp.eq.s32.totalorder %s33, 1
      %p187 = por %p185, %p186
      %p189 = scmp.ne.s32.totalorder %s174, %s188
      %p190 = scmp.eq.s32.totalorder %s33, 0
      %p191 = por %p189, %p190
      %s193 = sadd.s32 %s192, 1
      %p196 = scmp.eq.s32.totalorder %s27, 1
      %p197 = scmp.ne.s32.totalorder %s192, %s194
      %p198 = scmp.eq.s32.totalorder %s27, 0
      %p199 = por %p197, %p198
      %p200 = scmp.ne.s32.totalorder %s192, %s194
      %p201 = scmp.eq.s32.totalorder %s32, 1
      %p202 = por %p200, %p201
      %p203 = scmp.ne.s32.totalorder %s194, %s195
      %p204 = scmp.eq.s32.totalorder %s32, 0
      %p205 = por %p203, %p204
      %p206 = scmp.ne.s32.totalorder %s194, %s195
      %p207 = scmp.eq.s32.totalorder %s33, 1
      %p208 = por %p206, %p207
      %p210 = scmp.ne.s32.totalorder %s195, %s209
      %p211 = scmp.eq.s32.totalorder %s33, 0
      %p212 = por %p210, %p211
      %s214 = sadd.s32 %s213, 1
      %p217 = scmp.eq.s32.totalorder %s27, 1
      %p218 = scmp.ne.s32.totalorder %s213, %s215
      %p219 = scmp.eq.s32.totalorder %s27, 0
      %p220 = por %p218, %p219
      %p221 = scmp.ne.s32.totalorder %s213, %s215
      %p222 = scmp.eq.s32.totalorder %s32, 1
      %p223 = por %p221, %p222
      %p224 = scmp.ne.s32.totalorder %s215, %s216
      %p225 = scmp.eq.s32.totalorder %s32, 0
      %p226 = por %p224, %p225
      %p227 = scmp.ne.s32.totalorder %s215, %s216
      %p228 = scmp.eq.s32.totalorder %s33, 1
      %p229 = por %p227, %p228
      %p231 = scmp.ne.s32.totalorder %s216, %s230
      %p232 = scmp.eq.s32.totalorder %s33, 0
      %p233 = por %p231, %p232
      %s235 = sadd.s32 %s234, 1
      %p238 = scmp.eq.s32.totalorder %s27, 1
      %p239 = scmp.ne.s32.totalorder %s234, %s236
      %p240 = scmp.eq.s32.totalorder %s27, 0
      %p241 = por %p239, %p240
      %p242 = scmp.ne.s32.totalorder %s234, %s236
      %p243 = scmp.eq.s32.totalorder %s32, 1
      %p244 = por %p242, %p243
      %p245 = scmp.ne.s32.totalorder %s236, %s237
      %p246 = scmp.eq.s32.totalorder %s32, 0
      %p247 = por %p245, %p246
      %p248 = scmp.ne.s32.totalorder %s236, %s237
      %p249 = scmp.eq.s32.totalorder %s33, 1
      %p250 = por %p248, %p249
      %p252 = scmp.ne.s32.totalorder %s237, %s251
      %p253 = scmp.eq.s32.totalorder %s33, 0
      %p254 = por %p252, %p253
      %s256 = sadd.s32 %s255, 1
      %p259 = scmp.eq.s32.totalorder %s27, 1
      %p260 = scmp.ne.s32.totalorder %s255, %s257
      %p261 = scmp.eq.s32.totalorder %s27, 0
      %p262 = por %p260, %p261
      %p263 = scmp.ne.s32.totalorder %s255, %s257
      %p264 = scmp.eq.s32.totalorder %s32, 1
      %p265 = por %p263, %p264
      %p266 = scmp.ne.s32.totalorder %s257, %s258
      %p267 = scmp.eq.s32.totalorder %s32, 0
      %p268 = por %p266, %p267
      %p269 = scmp.ne.s32.totalorder %s257, %s258
      %p270 = scmp.eq.s32.totalorder %s33, 1
      %p271 = por %p269, %p270
      %p273 = scmp.ne.s32.totalorder %s258, %s272
      %p274 = scmp.eq.s32.totalorder %s33, 0
      %p275 = por %p273, %p274
      %s277 = sadd.s32 %s276, 1
      %p280 = scmp.eq.s32.totalorder %s27, 1
      %p281 = scmp.ne.s32.totalorder %s276, %s278
      %p282 = scmp.eq.s32.totalorder %s27, 0
      %p283 = por %p281, %p282
      %p284 = scmp.ne.s32.totalorder %s276, %s278
      %p285 = scmp.eq.s32.totalorder %s32, 1
      %p286 = por %p284, %p285
      %p287 = scmp.ne.s32.totalorder %s278, %s279
      %p288 = scmp.eq.s32.totalorder %s32, 0
      %p289 = por %p287, %p288
      %p290 = scmp.ne.s32.totalorder %s278, %s279
      %p291 = scmp.eq.s32.totalorder %s33, 1
      %p292 = por %p290, %p291
      %p294 = scmp.ne.s32.totalorder %s279, %s293
      %p295 = scmp.eq.s32.totalorder %s33, 0
      %p296 = por %p294, %p295
      %s298 = sadd.s32 %s297, 1
      %p301 = scmp.eq.s32.totalorder %s27, 1
      %p302 = scmp.ne.s32.totalorder %s297, %s299
      %p303 = scmp.eq.s32.totalorder %s27, 0
      %p304 = por %p302, %p303
      %p305 = scmp.ne.s32.totalorder %s297, %s299
      %p306 = scmp.eq.s32.totalorder %s32, 1
      %p307 = por %p305, %p306
      %p308 = scmp.ne.s32.totalorder %s299, %s300
      %p309 = scmp.eq.s32.totalorder %s32, 0
      %p310 = por %p308, %p309
      %p311 = scmp.ne.s32.totalorder %s299, %s300
      %p312 = scmp.eq.s32.totalorder %s33, 1
      %p313 = por %p311, %p312
      %p315 = scmp.ne.s32.totalorder %s300, %s314
      %p316 = scmp.eq.s32.totalorder %s33, 0
      %p317 = por %p315, %p316
      %s319 = sadd.s32 %s318, 1
      %p322 = scmp.eq.s32.totalorder %s27, 1
      %p323 = scmp.ne.s32.totalorder %s318, %s320
      %p324 = scmp.eq.s32.totalorder %s27, 0
      %p325 = por %p323, %p324
      %p326 = scmp.ne.s32.totalorder %s318, %s320
      %p327 = scmp.eq.s32.totalorder %s32, 1
      %p328 = por %p326, %p327
      %p329 = scmp.ne.s32.totalorder %s320, %s321
      %p330 = scmp.eq.s32.totalorder %s32, 0
      %p331 = por %p329, %p330
      %p332 = scmp.ne.s32.totalorder %s320, %s321
      %p333 = scmp.eq.s32.totalorder %s33, 1
      %p334 = por %p332, %p333
      %p336 = scmp.ne.s32.totalorder %s321, %s335
      %p337 = scmp.eq.s32.totalorder %s33, 0
      %p338 = por %p336, %p337
      %s340 = sadd.s32 %s339, 1
      %p343 = scmp.eq.s32.totalorder %s27, 1
      %p344 = scmp.ne.s32.totalorder %s339, %s341
      %p345 = scmp.eq.s32.totalorder %s27, 0
      %p346 = por %p344, %p345
      %p347 = scmp.ne.s32.totalorder %s339, %s341
      %p348 = scmp.eq.s32.totalorder %s32, 1
      %p349 = por %p347, %p348
      %p350 = scmp.ne.s32.totalorder %s341, %s342
      %p351 = scmp.eq.s32.totalorder %s32, 0
      %p352 = por %p350, %p351
      %p353 = scmp.ne.s32.totalorder %s341, %s342
      %p354 = scmp.eq.s32.totalorder %s33, 1
      %p355 = por %p353, %p354
      %p357 = scmp.ne.s32.totalorder %s342, %s356
      %p358 = scmp.eq.s32.totalorder %s33, 0
      %p359 = por %p357, %p358
      %s361 = sadd.s32 %s360, 1
      %p364 = scmp.eq.s32.totalorder %s27, 1
      %p365 = scmp.ne.s32.totalorder %s360, %s362
      %p366 = scmp.eq.s32.totalorder %s27, 0
      %p367 = por %p365, %p366
      %p368 = scmp.ne.s32.totalorder %s360, %s362
      %p369 = scmp.eq.s32.totalorder %s32, 1
      %p370 = por %p368, %p369
      %p371 = scmp.ne.s32.totalorder %s362, %s363
      %p372 = scmp.eq.s32.totalorder %s32, 0
      %p373 = por %p371, %p372
      %p374 = scmp.ne.s32.totalorder %s362, %s363
      %p375 = scmp.eq.s32.totalorder %s33, 1
      %p376 = por %p374, %p375
      %p378 = scmp.ne.s32.totalorder %s363, %s377
      %p379 = scmp.eq.s32.totalorder %s33, 0
      %p380 = por %p378, %p379
      %s382 = sadd.s32 %s381, 1
      %p385 = scmp.eq.s32.totalorder %s27, 1
      %p386 = scmp.ne.s32.totalorder %s381, %s383
      %p387 = scmp.eq.s32.totalorder %s27, 0
      %p388 = por %p386, %p387
      %p389 = scmp.ne.s32.totalorder %s381, %s383
      %p390 = scmp.eq.s32.totalorder %s32, 1
      %p391 = por %p389, %p390
      %p392 = scmp.ne.s32.totalorder %s383, %s384
      %p393 = scmp.eq.s32.totalorder %s32, 0
      %p394 = por %p392, %p393
      %p395 = scmp.ne.s32.totalorder %s383, %s384
      %p396 = scmp.eq.s32.totalorder %s33, 1
      %p397 = por %p395, %p396
      %p399 = scmp.ne.s32.totalorder %s384, %s398
      %p400 = scmp.eq.s32.totalorder %s33, 0
      %p401 = por %p399, %p400
      %s403 = sadd.s32 %s402, 1
      %p406 = scmp.eq.s32.totalorder %s27, 1
      %p407 = scmp.ne.s32.totalorder %s402, %s404
      %p408 = scmp.eq.s32.totalorder %s27, 0
      %p409 = por %p407, %p408
      %p410 = scmp.ne.s32.totalorder %s402, %s404
      %p411 = scmp.eq.s32.totalorder %s32, 1
      %p412 = por %p410, %p411
      %p413 = scmp.ne.s32.totalorder %s404, %s405
      %p414 = scmp.eq.s32.totalorder %s32, 0
      %p415 = por %p413, %p414
      %p416 = scmp.ne.s32.totalorder %s404, %s405
      %p417 = scmp.eq.s32.totalorder %s33, 1
      %p418 = por %p416, %p417
      %p420 = scmp.ne.s32.totalorder %s405, %s419
      %p421 = scmp.eq.s32.totalorder %s33, 0
      %p422 = por %p420, %p421
      %s423 = ssub.s32 %s27, %s34
      %p424 = scmp.eq.s32.totalorder %s423, 0
      %s426 = sadd.s32 %s425, 1
      %s427 = scalar_select %p424, %s425, %s426
      %p430 = pneg %p424
      %p431 = scmp.eq.s32.totalorder %s27, 1
      %p432 = por %p430, %p431
      %p433 = scmp.ne.s32.totalorder %s425, %s428
      %p434 = scmp.eq.s32.totalorder %s27, 0
      %p435 = por %p433, %p434
      %p436 = scmp.ne.s32.totalorder %s425, %s428
      %p437 = scmp.eq.s32.totalorder %s32, 1
      %p438 = por %p436, %p437
      %p439 = scmp.ne.s32.totalorder %s428, %s429
      %p440 = scmp.eq.s32.totalorder %s32, 0
      %p441 = por %p439, %p440
      %p442 = scmp.ne.s32.totalorder %s428, %s429
      %p443 = scmp.eq.s32.totalorder %s33, 1
      %p444 = por %p442, %p443
      %p446 = scmp.ne.s32.totalorder %s429, %s445
      %p447 = scmp.eq.s32.totalorder %s33, 0
      %p448 = por %p446, %p447
      %p449 = scmp.le.s32.totalorder 1, %s27
      %p450 = scmp.lt.s32.totalorder %s27, 3
      %p451 = pnand %p449, %p450
      %p452 = pneg %p451
      // Predicated region
      $region9: #{tpu_custom_call.1} parent=5 // pred_check
        _
      $region10: #{tpu_custom_call.1} parent=5 // pred_check_branch
        %454 = sbr.rel (%p451) target = $region12
      $region11: #{tpu_custom_call.1} parent=5 // pred_region
        %s455 = ssub.s32 %s27, 1
        // Predicated region
        $region13: #{tpu_custom_call.1} parent=11 // pred_check
          %p456 = pneg %p100
        $region14: #{tpu_custom_call.1} parent=11 // pred_check_branch
          %458 = sbr.rel (%p456) target = $region16
        $region15: #{tpu_custom_call.1} parent=11 // pred_region
          _
        $region16: #{tpu_custom_call.1} parent=11 // pred_fallthru
          _
        // Predicated region
        $region17: #{tpu_custom_call.1} parent=11 // pred_check
          %p459 = pneg %p121
        $region18: #{tpu_custom_call.1} parent=11 // pred_check_branch
          %461 = sbr.rel (%p459) target = $region20
        $region19: #{tpu_custom_call.1} parent=11 // pred_region
          _
        $region20: #{tpu_custom_call.1} parent=11 // pred_fallthru
          _
        // Predicated region
        $region21: #{tpu_custom_call.1} parent=11 // pred_check
          %p462 = pneg %p142
        $region22: #{tpu_custom_call.1} parent=11 // pred_check_branch
          %464 = sbr.rel (%p462) target = $region24
        $region23: #{tpu_custom_call.1} parent=11 // pred_region
          _
        $region24: #{tpu_custom_call.1} parent=11 // pred_fallthru
          _
        // Predicated region
        $region25: #{tpu_custom_call.1} parent=11 // pred_check
          %p465 = pneg %p163
        $region26: #{tpu_custom_call.1} parent=11 // pred_check_branch
          %467 = sbr.rel (%p465) target = $region28
        $region27: #{tpu_custom_call.1} parent=11 // pred_region
          _
        $region28: #{tpu_custom_call.1} parent=11 // pred_fallthru
          _
        // Predicated region
        $region29: #{tpu_custom_call.1} parent=11 // pred_check
          %p468 = pneg %p184
        $region30: #{tpu_custom_call.1} parent=11 // pred_check_branch
          %470 = sbr.rel (%p468) target = $region32
        $region31: #{tpu_custom_call.1} parent=11 // pred_region
          _
        $region32: #{tpu_custom_call.1} parent=11 // pred_fallthru
          _
        // Predicated region
        $region33: #{tpu_custom_call.1} parent=11 // pred_check
          %p471 = pneg %p205
        $region34: #{tpu_custom_call.1} parent=11 // pred_check_branch
          %473 = sbr.rel (%p471) target = $region36
        $region35: #{tpu_custom_call.1} parent=11 // pred_region
          _
        $region36: #{tpu_custom_call.1} parent=11 // pred_fallthru
          _
        // Predicated region
        $region37: #{tpu_custom_call.1} parent=11 // pred_check
          %p474 = pneg %p226
        $region38: #{tpu_custom_call.1} parent=11 // pred_check_branch
          %476 = sbr.rel (%p474) target = $region40
        $region39: #{tpu_custom_call.1} parent=11 // pred_region
          _
        $region40: #{tpu_custom_call.1} parent=11 // pred_fallthru
          _
        // Predicated region
        $region41: #{tpu_custom_call.1} parent=11 // pred_check
          %p477 = pneg %p247
        $region42: #{tpu_custom_call.1} parent=11 // pred_check_branch
          %479 = sbr.rel (%p477) target = $region44
        $region43: #{tpu_custom_call.1} parent=11 // pred_region
          _
        $region44: #{tpu_custom_call.1} parent=11 // pred_fallthru
          _
        // Predicated region
        $region45: #{tpu_custom_call.1} parent=11 // pred_check
          %p480 = pneg %p268
        $region46: #{tpu_custom_call.1} parent=11 // pred_check_branch
          %482 = sbr.rel (%p480) target = $region48
        $region47: #{tpu_custom_call.1} parent=11 // pred_region
          _
        $region48: #{tpu_custom_call.1} parent=11 // pred_fallthru
          _
        // Predicated region
        $region49: #{tpu_custom_call.1} parent=11 // pred_check
          %p483 = pneg %p289
        $region50: #{tpu_custom_call.1} parent=11 // pred_check_branch
          %485 = sbr.rel (%p483) target = $region52
        $region51: #{tpu_custom_call.1} parent=11 // pred_region
          _
        $region52: #{tpu_custom_call.1} parent=11 // pred_fallthru
          _
        // Predicated region
        $region53: #{tpu_custom_call.1} parent=11 // pred_check
          %p486 = pneg %p310
        $region54: #{tpu_custom_call.1} parent=11 // pred_check_branch
          %488 = sbr.rel (%p486) target = $region56
        $region55: #{tpu_custom_call.1} parent=11 // pred_region
          _
        $region56: #{tpu_custom_call.1} parent=11 // pred_fallthru
          _
        // Predicated region
        $region57: #{tpu_custom_call.1} parent=11 // pred_check
          %p489 = pneg %p331
        $region58: #{tpu_custom_call.1} parent=11 // pred_check_branch
          %491 = sbr.rel (%p489) target = $region60
        $region59: #{tpu_custom_call.1} parent=11 // pred_region
          _
        $region60: #{tpu_custom_call.1} parent=11 // pred_fallthru
          _
        // Predicated region
        $region61: #{tpu_custom_call.1} parent=11 // pred_check
          %p492 = pneg %p352
        $region62: #{tpu_custom_call.1} parent=11 // pred_check_branch
          %494 = sbr.rel (%p492) target = $region64
        $region63: #{tpu_custom_call.1} parent=11 // pred_region
          _
        $region64: #{tpu_custom_call.1} parent=11 // pred_fallthru
          _
        // Predicated region
        $region65: #{tpu_custom_call.1} parent=11 // pred_check
          %p495 = pneg %p373
        $region66: #{tpu_custom_call.1} parent=11 // pred_check_branch
          %497 = sbr.rel (%p495) target = $region68
        $region67: #{tpu_custom_call.1} parent=11 // pred_region
          _
        $region68: #{tpu_custom_call.1} parent=11 // pred_fallthru
          _
        // Predicated region
        $region69: #{tpu_custom_call.1} parent=11 // pred_check
          %p498 = pneg %p394
        $region70: #{tpu_custom_call.1} parent=11 // pred_check_branch
          %500 = sbr.rel (%p498) target = $region72
        $region71: #{tpu_custom_call.1} parent=11 // pred_region
          _
        $region72: #{tpu_custom_call.1} parent=11 // pred_fallthru
          _
        // Predicated region
        $region73: #{tpu_custom_call.1} parent=11 // pred_check
          %p501 = pneg %p415
        $region74: #{tpu_custom_call.1} parent=11 // pred_check_branch
          %503 = sbr.rel (%p501) target = $region76
        $region75: #{tpu_custom_call.1} parent=11 // pred_region
          _
        $region76: #{tpu_custom_call.1} parent=11 // pred_fallthru
          _
      $region12: #{tpu_custom_call.1} parent=5 // pred_fallthru
        _
      %p504 = scmp.lt.s32.totalorder %s27, 2
      // Predicated region
      $region77: #{tpu_custom_call.1} parent=5 // pred_check
        %p505 = pneg %p504
      $region78: #{tpu_custom_call.1} parent=5 // pred_check_branch
        %507 = sbr.rel (%p505) target = $region80
      $region79: #{tpu_custom_call.1} parent=5 // pred_region
        // Predicated region
        $region81: #{tpu_custom_call.1} parent=79 // pred_check
          %p508 = pneg %p47
        $region82: #{tpu_custom_call.1} parent=79 // pred_check_branch
          %510 = sbr.rel (%p508) target = $region84
        $region83: #{tpu_custom_call.1} parent=79 // pred_region
          %p511 = scmp.lt.s32.totalorder %s27, 1
          %s512 = scalar_select %p511, %s27, 1
          %s513 = smul.addr %s512, 4
          %s514 = scalar_lea.vmem %s0, %s513
        $region84: #{tpu_custom_call.1} parent=79 // pred_fallthru
          _
        // Predicated region
        $region85: #{tpu_custom_call.1} parent=79 // pred_check
          %p515 = pneg %p73
        $region86: #{tpu_custom_call.1} parent=79 // pred_check_branch
          %517 = sbr.rel (%p515) target = $region88
        $region87: #{tpu_custom_call.1} parent=79 // pred_region
          %p518 = scmp.lt.s32.totalorder %s27, 1
          %s519 = scalar_select %p518, %s27, 1
          %s520 = scalar_lea.vmem %s1, %s519
        $region88: #{tpu_custom_call.1} parent=79 // pred_fallthru
          _
      $region80: #{tpu_custom_call.1} parent=5 // pred_fallthru
        _
      %p521 = scmp.le.s32.totalorder 1, %s27
      %p522 = scmp.lt.s32.totalorder %s27, 3
      %p523 = pnand %p521, %p522
      %p524 = pneg %p523
      // Predicated region
      $region89: #{tpu_custom_call.1} parent=5 // pred_check
        _
      $region90: #{tpu_custom_call.1} parent=5 // pred_check_branch
        %526 = sbr.rel (%p523) target = $region92
      $region91: #{tpu_custom_call.1} parent=5 // pred_region
        %s527 = ssub.s32 %s27, 1
        %p528 = scmp.lt.s32.totalorder %s32, 1
        %s529 = scalar_select %p528, %s32, 1
        %s530 = smul.addr %s529, 4
        %s531 = scalar_lea.vmem %s0, %s530
        %p532 = pneg %p53
        %p533 = pneg %p50
        %p534 = scmp.lt.s32.totalorder %s32, 1
        %s535 = scalar_select %p534, %s32, 1
        %s536 = scalar_lea.vmem %s1, %s535
        %p537 = pneg %p79
        %p538 = pneg %p76
        %p539 = pneg %p100
        %p540 = pneg %p97
        %p541 = pneg %p121
        %p542 = pneg %p118
        %p543 = pneg %p142
        %p544 = pneg %p139
        %p545 = pneg %p163
        %p546 = pneg %p160
        %p547 = pneg %p184
        %p548 = pneg %p181
        %p549 = pneg %p205
        %p550 = pneg %p202
        %p551 = pneg %p226
        %p552 = pneg %p223
        %p553 = pneg %p247
        %p554 = pneg %p244
        %p555 = pneg %p268
        %p556 = pneg %p265
        %p557 = pneg %p289
        %p558 = pneg %p286
        %p559 = pneg %p310
        %p560 = pneg %p307
        %p561 = pneg %p331
        %p562 = pneg %p328
        %p563 = pneg %p352
        %p564 = pneg %p349
        %p565 = pneg %p373
        %p566 = pneg %p370
        %p567 = pneg %p394
        %p568 = pneg %p391
        %p569 = pneg %p415
        %p570 = pneg %p412
        %p571 = pneg %p441
        %p572 = pneg %p438
        %s573 = sand.u32 %s428, 1
        %s574 = scalar_lea.sflag [#allocation3], %s573
        %s575 = sand.u32 %s428, 1
        %s576 = smul.addr %s575, 4
        %s577 = scalar_lea.vmem [#allocation2], %s576
        %p578 = scmp.lt.s32.totalorder %s32, 1
        %s579 = scalar_select %p578, %s32, 1
        %s580 = smul.addr %s579, 4
        %s581 = scalar_lea.vmem %s0, %s580
        %p582 = scmp.lt.s32.totalorder %s32, 1
        %s583 = scalar_select %p582, %s32, 1
        %s584 = scalar_lea.vmem %s1, %s583
        %v586 = vld [vmem:[%s581] sm:$0xf]
        %v587 = vunpack.c.l.bf16 %v586
        %v588 = vld [vmem:[%s584] sm:$0x1]
        %vm589 = vcmp.gt.f32.partialorder %v588, 0.0
        %v590 = vsel %vm589, 0.0, -1e+09
        %v591 = vld [vmem:[%s2] sm:$0x1]
        %v592 = vld [vmem:[%s3] sm:$0x1]
        %vm593 = vcmask 261120
        %v594 = vsel %vm593, %v587, 0.0
        %595 = vadd.xlane.f32.xlu0 %v594
        %v596 = vpop.xlane.xlu0 %595
        %v597 = vrcp.pop 32.0
        %v598 = vmul.f32 32.0, %v597
        %v599 = vsub.f32 1.0, %v598
        %v600 = vmul.f32 %v597, %v599
        %v601 = vadd.f32 %v597, %v600
        %vm602 = vweird.f32 %v597
        %v603 = vsel %vm602, %v597, %v601
        %v604 = vmul.f32 %v596, %v603
        %v605 = vsub.f32 %v587, %v604
        %v606 = vmul.f32 %v605, %v605
        %v607 = vsel %vm593, %v606, 0.0
        %608 = vadd.xlane.f32.xlu0 %v607
        %v609 = vpop.xlane.xlu0 %608
        %v610 = vmul.f32 %v609, %v603
        %v611 = vadd.f32 %v610, 1e-05
        %v612 = vrsqrt.pop %v611
        %v613 = vmul.f32 %v612, %v611
        %v614 = vmul.f32 %v613, %v612
        %v615 = vmul.f32 0.5, %v614
        %v616 = vsub.f32 1.5, %v615
        %v617 = vmul.f32 %v612, %v616
        %vm618 = vweird.f32 %v611
        %vm619 = vweird.f32 %v612
        %vm620 = vmor %vm618, %vm619
        %v621 = vsel %vm620, %v612, %v617
        %v622 = vmul.f32 %v605, %v621
        %v624 = vperm.slane %v591, 0
        %v626 = vmul.f32 %v622, %v624
        %v628 = vperm.slane %v592, 0
        %v630 = vadd.f32 %v626, %v628
        %v631 = vpack.c.bf16 %v630, %v630
        %v632 = vld [vmem:[%s4] sm:$0xf]
        %v633 = vld [vmem:[%s4 + $0x4] sm:$0xf]
        %v634 = vld [vmem:[%s4 + $0x8] sm:$0xf]
        %v635 = vld [vmem:[%s4 + $0xc] sm:$0xf]
        %v636 = vld [vmem:[%s5] sm:$0x1]
        %v638 = vperm.slane %v636, 0
        %v644 = vunpack.c.l.b16 %v632
        %v645 = vunpack.c.l.b16 %v633
        %v646 = vunpack.c.l.b16 %v634
        %v647 = vunpack.c.l.b16 %v635
        %v648 = vpack.c.b16 %v645, %v644
        %v649 = vpack.c.b16 %v647, %v646
        %v653 = vsel %vm593, %v631, 0
        %655 = vmatpush.bf16.msra.mxu0 0
        %656 = vmatpush.bf16.msra.mxu0 0
        %657 = vmatpush.bf16.msra.mxu0 0
        %658 = vmatpush.bf16.msra.mxu0 0
        %659 = vmatpush.bf16.msra.mxu0 0
        %660 = vmatpush.bf16.msra.mxu0 0
        %661 = vmatpush.bf16.msra.mxu0 %v649
        %662 = vmatpush.bf16.msra.mxu0 %v648
        %663 = vmatmul.bf16.gmra.mxu0 %v653
        %v664 = vpop.f32.mrf.mxu0
        %v665 = vadd.f32 %v638, %v664
        %v666 = vpop.f32.mrf.mxu0
        %667 = vdwg.mxu0
        %v668 = vld [vmem:[%s6] sm:$0xf]
        %v669 = vld [vmem:[%s6 + $0x4] sm:$0xf]
        %v670 = vld [vmem:[%s6 + $0x8] sm:$0xf]
        %v671 = vld [vmem:[%s6 + $0xc] sm:$0xf]
        %v672 = vld [vmem:[%s7] sm:$0x1]
        %v674 = vperm.slane %v672, 0
        %v680 = vunpack.c.l.b16 %v668
        %v681 = vunpack.c.l.b16 %v669
        %v682 = vunpack.c.l.b16 %v670
        %v683 = vunpack.c.l.b16 %v671
        %v684 = vpack.c.b16 %v681, %v680
        %v685 = vpack.c.b16 %v683, %v682
        %688 = vmatpush.bf16.msra.mxu0 0
        %689 = vmatpush.bf16.msra.mxu0 0
        %690 = vmatpush.bf16.msra.mxu0 0
        %691 = vmatpush.bf16.msra.mxu0 0
        %692 = vmatpush.bf16.msra.mxu0 0
        %693 = vmatpush.bf16.msra.mxu0 0
        %694 = vmatpush.bf16.msra.mxu0 %v685
        %695 = vmatpush.bf16.msra.mxu0 %v684
        %696 = vmatmul.bf16.gmra.mxu0 %v653
        %v697 = vpop.f32.mrf.mxu0
        %v698 = vadd.f32 %v674, %v697
        %v699 = vpop.f32.mrf.mxu0
        %700 = vdwg.mxu0
        %v701 = vld [vmem:[%s8] sm:$0xf]
        %v702 = vld [vmem:[%s8 + $0x4] sm:$0xf]
        %v703 = vld [vmem:[%s8 + $0x8] sm:$0xf]
        %v704 = vld [vmem:[%s8 + $0xc] sm:$0xf]
        %v705 = vld [vmem:[%s9] sm:$0x1]
        %v707 = vperm.slane %v705, 0
        %v713 = vunpack.c.l.b16 %v701
        %v714 = vunpack.c.l.b16 %v702
        %v715 = vunpack.c.l.b16 %v703
        %v716 = vunpack.c.l.b16 %v704
        %v717 = vpack.c.b16 %v714, %v713
        %v718 = vpack.c.b16 %v716, %v715
        %721 = vmatpush.bf16.msra.mxu0 0
        %722 = vmatpush.bf16.msra.mxu0 0
        %723 = vmatpush.bf16.msra.mxu0 0
        %724 = vmatpush.bf16.msra.mxu0 0
        %725 = vmatpush.bf16.msra.mxu0 0
        %726 = vmatpush.bf16.msra.mxu0 0
        %727 = vmatpush.bf16.msra.mxu0 %v718
        %728 = vmatpush.bf16.msra.mxu0 %v717
        %729 = vmatmul.bf16.gmra.mxu0 %v653
        %v730 = vpop.f32.mrf.mxu0
        %v731 = vadd.f32 %v707, %v730
        %v732 = vpop.f32.mrf.mxu0
        %733 = vdwg.mxu0
        %v734 = vpack.c.bf16 %v665, %v665
        %v735 = vpack.c.bf16 %v698, %v698
        %v737 = vperm.slane %v590, 0
        %vm739 = vcmask 64512
        %v741 = vsel %vm739, %v734, 0
        %v744 = vsel %vm739, %v735, 0
        %746 = vmatpush.bf16.xpose.msra.mxu0 0
        %747 = vmatpush.bf16.xpose.msra.mxu0 0
        %748 = vmatpush.bf16.xpose.msra.mxu0 0
        %749 = vmatpush.bf16.xpose.msra.mxu0 0
        %750 = vmatpush.bf16.xpose.msra.mxu0 0
        %751 = vmatpush.bf16.xpose.msra.mxu0 0
        %752 = vmatpush.bf16.xpose.msra.mxu0 0
        %753 = vmatpush.bf16.xpose.msra.mxu0 %v744
        %754 = vmatmul.bf16.gmra.mxu0 %v741
        %v755 = vpop.f32.mrf.mxu0
        %v756 = vadd.f32 %v737, %v755
        %v757 = vpop.f32.mrf.mxu0
        %758 = vdwg.mxu0
        %v759 = vsel %vm739, %v756, -inf
        %760 = vmax.xlane.f32.xlu0 %v759
        %v761 = vpop.xlane.xlu0 %760
        %v762 = vsub.f32 %v756, %v761
        %v763 = vmul.f32 %v762, 1.442695
        %v764 = vpow.pop %v763
        %v765 = vsel %vm739, %v764, 0.0
        %766 = vadd.xlane.f32.xlu0 %v765
        %v767 = vpop.xlane.xlu0 %766
        %v768 = vrcp.pop %v767
        %v769 = vmul.f32 %v764, %v768
        %v770 = vpack.c.bf16 %v769, %v769
        %v771 = vpack.c.bf16 %v731, %v731
        %v773 = vsel %vm739, %v770, 0
        %vm775 = vcmask 1043456
        %v777 = vsel %vm775, %v771, 0
        %779 = vmatpush.bf16.msra.mxu0 0
        %780 = vmatpush.bf16.msra.mxu0 0
        %781 = vmatpush.bf16.msra.mxu0 0
        %782 = vmatpush.bf16.msra.mxu0 0
        %783 = vmatpush.bf16.msra.mxu0 0
        %784 = vmatpush.bf16.msra.mxu0 0
        %785 = vmatpush.bf16.msra.mxu0 0
        %786 = vmatpush.bf16.msra.mxu0 %v777
        %787 = vmatmul.bf16.gmra.mxu0 %v773
        %v788 = vpop.f32.mrf.mxu0
        %v789 = vadd.f32 0.0, %v788
        %v790 = vpop.f32.mrf.mxu0
        %791 = vdwg.mxu0
        %v792 = vpack.c.bf16 %v789, %v789
        %v793 = vld [vmem:[%s10] sm:$0xf]
        %s794 = scalar_lea.vmem %s4, 16
        %v795 = vld [vmem:[%s794] sm:$0xf]
        %v796 = vld [vmem:[%s794 + $0x4] sm:$0xf]
        %v797 = vld [vmem:[%s794 + $0x8] sm:$0xf]
        %v798 = vld [vmem:[%s794 + $0xc] sm:$0xf]
        %s799 = scalar_lea.vmem %s5, 1
        %v800 = vld [vmem:[%s799] sm:$0x1]
        %v802 = vperm.slane %v800, 0
        %v808 = vunpack.c.l.b16 %v795
        %v809 = vunpack.c.l.b16 %v796
        %v810 = vunpack.c.l.b16 %v797
        %v811 = vunpack.c.l.b16 %v798
        %v812 = vpack.c.b16 %v809, %v808
        %v813 = vpack.c.b16 %v811, %v810
        %816 = vmatpush.bf16.msra.mxu0 0
        %817 = vmatpush.bf16.msra.mxu0 0
        %818 = vmatpush.bf16.msra.mxu0 0
        %819 = vmatpush.bf16.msra.mxu0 0
        %820 = vmatpush.bf16.msra.mxu0 0
        %821 = vmatpush.bf16.msra.mxu0 0
        %822 = vmatpush.bf16.msra.mxu0 %v813
        %823 = vmatpush.bf16.msra.mxu0 %v812
        %824 = vmatmul.bf16.gmra.mxu0 %v653
        %v825 = vpop.f32.mrf.mxu0
        %v826 = vadd.f32 %v802, %v825
        %v827 = vpop.f32.mrf.mxu0
        %828 = vdwg.mxu0
        %s829 = scalar_lea.vmem %s6, 16
        %v830 = vld [vmem:[%s829] sm:$0xf]
        %v831 = vld [vmem:[%s829 + $0x4] sm:$0xf]
        %v832 = vld [vmem:[%s829 + $0x8] sm:$0xf]
        %v833 = vld [vmem:[%s829 + $0xc] sm:$0xf]
        %s834 = scalar_lea.vmem %s7, 1
        %v835 = vld [vmem:[%s834] sm:$0x1]
        %v837 = vperm.slane %v835, 0
        %v843 = vunpack.c.l.b16 %v830
        %v844 = vunpack.c.l.b16 %v831
        %v845 = vunpack.c.l.b16 %v832
        %v846 = vunpack.c.l.b16 %v833
        %v847 = vpack.c.b16 %v844, %v843
        %v848 = vpack.c.b16 %v846, %v845
        %851 = vmatpush.bf16.msra.mxu0 0
        %852 = vmatpush.bf16.msra.mxu0 0
        %853 = vmatpush.bf16.msra.mxu0 0
        %854 = vmatpush.bf16.msra.mxu0 0
        %855 = vmatpush.bf16.msra.mxu0 0
        %856 = vmatpush.bf16.msra.mxu0 0
        %857 = vmatpush.bf16.msra.mxu0 %v848
        %858 = vmatpush.bf16.msra.mxu0 %v847
        %859 = vmatmul.bf16.gmra.mxu0 %v653
        %v860 = vpop.f32.mrf.mxu0
        %v861 = vadd.f32 %v837, %v860
        %v862 = vpop.f32.mrf.mxu0
        %863 = vdwg.mxu0
        %s864 = scalar_lea.vmem %s8, 16
        %v865 = vld [vmem:[%s864] sm:$0xf]
        %v866 = vld [vmem:[%s864 + $0x4] sm:$0xf]
        %v867 = vld [vmem:[%s864 + $0x8] sm:$0xf]
        %v868 = vld [vmem:[%s864 + $0xc] sm:$0xf]
        %s869 = scalar_lea.vmem %s9, 1
        %v870 = vld [vmem:[%s869] sm:$0x1]
        %v872 = vperm.slane %v870, 0
        %v878 = vunpack.c.l.b16 %v865
        %v879 = vunpack.c.l.b16 %v866
        %v880 = vunpack.c.l.b16 %v867
        %v881 = vunpack.c.l.b16 %v868
        %v882 = vpack.c.b16 %v879, %v878
        %v883 = vpack.c.b16 %v881, %v880
        %886 = vmatpush.bf16.msra.mxu0 0
        %887 = vmatpush.bf16.msra.mxu0 0
        %888 = vmatpush.bf16.msra.mxu0 0
        %889 = vmatpush.bf16.msra.mxu0 0
        %890 = vmatpush.bf16.msra.mxu0 0
        %891 = vmatpush.bf16.msra.mxu0 0
        %892 = vmatpush.bf16.msra.mxu0 %v883
        %893 = vmatpush.bf16.msra.mxu0 %v882
        %894 = vmatmul.bf16.gmra.mxu0 %v653
        %v895 = vpop.f32.mrf.mxu0
        %v896 = vadd.f32 %v872, %v895
        %v897 = vpop.f32.mrf.mxu0
        %898 = vdwg.mxu0
        %v899 = vpack.c.bf16 %v826, %v826
        %v900 = vpack.c.bf16 %v861, %v861
        %v902 = vsel %vm739, %v899, 0
        %v905 = vsel %vm739, %v900, 0
        %907 = vmatpush.bf16.xpose.msra.mxu0 0
        %908 = vmatpush.bf16.xpose.msra.mxu0 0
        %909 = vmatpush.bf16.xpose.msra.mxu0 0
        %910 = vmatpush.bf16.xpose.msra.mxu0 0
        %911 = vmatpush.bf16.xpose.msra.mxu0 0
        %912 = vmatpush.bf16.xpose.msra.mxu0 0
        %913 = vmatpush.bf16.xpose.msra.mxu0 0
        %914 = vmatpush.bf16.xpose.msra.mxu0 %v905
        %915 = vmatmul.bf16.gmra.mxu0 %v902
        %v916 = vpop.f32.mrf.mxu0
        %v917 = vadd.f32 %v737, %v916
        %v918 = vpop.f32.mrf.mxu0
        %919 = vdwg.mxu0
        %v920 = vsel %vm739, %v917, -inf
        %921 = vmax.xlane.f32.xlu0 %v920
        %v922 = vpop.xlane.xlu0 %921
        %v923 = vsub.f32 %v917, %v922
        %v924 = vmul.f32 %v923, 1.442695
        %v925 = vpow.pop %v924
        %v926 = vsel %vm739, %v925, 0.0
        %927 = vadd.xlane.f32.xlu0 %v926
        %v928 = vpop.xlane.xlu0 %927
        %v929 = vrcp.pop %v928
        %v930 = vmul.f32 %v925, %v929
        %v931 = vpack.c.bf16 %v930, %v930
        %v932 = vpack.c.bf16 %v896, %v896
        %v934 = vsel %vm739, %v931, 0
        %v937 = vsel %vm775, %v932, 0
        %939 = vmatpush.bf16.msra.mxu0 0
        %940 = vmatpush.bf16.msra.mxu0 0
        %941 = vmatpush.bf16.msra.mxu0 0
        %942 = vmatpush.bf16.msra.mxu0 0
        %943 = vmatpush.bf16.msra.mxu0 0
        %944 = vmatpush.bf16.msra.mxu0 0
        %945 = vmatpush.bf16.msra.mxu0 0
        %946 = vmatpush.bf16.msra.mxu0 %v937
        %947 = vmatmul.bf16.gmra.mxu0 %v934
        %v948 = vpop.f32.mrf.mxu0
        %v949 = vadd.f32 0.0, %v948
        %v950 = vpop.f32.mrf.mxu0
        %951 = vdwg.mxu0
        %v952 = vpack.c.bf16 %v949, %v949
        %s953 = scalar_lea.vmem %s10, 4
        %v954 = vld [vmem:[%s953] sm:$0xf]
        %v956 = vsel %vm739, %v952, 0
        %v959 = vsel %vm775, %v954, 0
        %961 = vmatpush.bf16.msra.mxu0 0
        %962 = vmatpush.bf16.msra.mxu0 0
        %963 = vmatpush.bf16.msra.mxu0 0
        %964 = vmatpush.bf16.msra.mxu0 0
        %965 = vmatpush.bf16.msra.mxu0 0
        %966 = vmatpush.bf16.msra.mxu0 0
        %967 = vmatpush.bf16.msra.mxu0 0
        %968 = vmatpush.bf16.msra.mxu0 %v959
        %969 = vmatmul.bf16.gmra.mxu0 %v956
        %v970 = vpop.f32.mrf.mxu0
        %v971 = vadd.f32 0.0, %v970
        %v972 = vpop.f32.mrf.mxu0
        %973 = vdwg.mxu0
        %v975 = vsel %vm739, %v792, 0
        %v978 = vsel %vm775, %v793, 0
        %980 = vmatpush.bf16.msra.mxu0 0
        %981 = vmatpush.bf16.msra.mxu0 0
        %982 = vmatpush.bf16.msra.mxu0 0
        %983 = vmatpush.bf16.msra.mxu0 0
        %984 = vmatpush.bf16.msra.mxu0 0
        %985 = vmatpush.bf16.msra.mxu0 0
        %986 = vmatpush.bf16.msra.mxu0 0
        %987 = vmatpush.bf16.msra.mxu0 %v978
        %988 = vmatmul.bf16.gmra.mxu0 %v975
        %v989 = vpop.f32.mrf.mxu0
        %v990 = vadd.f32 %v971, %v989
        %v991 = vpop.f32.mrf.mxu0
        %992 = vdwg.mxu0
        %s993 = scalar_lea.vmem %s4, 32
        %v994 = vld [vmem:[%s993] sm:$0xf]
        %v995 = vld [vmem:[%s993 + $0x4] sm:$0xf]
        %v996 = vld [vmem:[%s993 + $0x8] sm:$0xf]
        %v997 = vld [vmem:[%s993 + $0xc] sm:$0xf]
        %s998 = scalar_lea.vmem %s5, 2
        %v999 = vld [vmem:[%s998] sm:$0x1]
        %v1001 = vperm.slane %v999, 0
        %v1007 = vunpack.c.l.b16 %v994
        %v1008 = vunpack.c.l.b16 %v995
        %v1009 = vunpack.c.l.b16 %v996
        %v1010 = vunpack.c.l.b16 %v997
        %v1011 = vpack.c.b16 %v1008, %v1007
        %v1012 = vpack.c.b16 %v1010, %v1009
        %1015 = vmatpush.bf16.msra.mxu0 0
        %1016 = vmatpush.bf16.msra.mxu0 0
        %1017 = vmatpush.bf16.msra.mxu0 0
        %1018 = vmatpush.bf16.msra.mxu0 0
        %1019 = vmatpush.bf16.msra.mxu0 0
        %1020 = vmatpush.bf16.msra.mxu0 0
        %1021 = vmatpush.bf16.msra.mxu0 %v1012
        %1022 = vmatpush.bf16.msra.mxu0 %v1011
        %1023 = vmatmul.bf16.gmra.mxu0 %v653
        %v1024 = vpop.f32.mrf.mxu0
        %v1025 = vadd.f32 %v1001, %v1024
        %v1026 = vpop.f32.mrf.mxu0
        %1027 = vdwg.mxu0
        %s1028 = scalar_lea.vmem %s6, 32
        %v1029 = vld [vmem:[%s1028] sm:$0xf]
        %v1030 = vld [vmem:[%s1028 + $0x4] sm:$0xf]
        %v1031 = vld [vmem:[%s1028 + $0x8] sm:$0xf]
        %v1032 = vld [vmem:[%s1028 + $0xc] sm:$0xf]
        %s1033 = scalar_lea.vmem %s7, 2
        %v1034 = vld [vmem:[%s1033] sm:$0x1]
        %v1036 = vperm.slane %v1034, 0
        %v1042 = vunpack.c.l.b16 %v1029
        %v1043 = vunpack.c.l.b16 %v1030
        %v1044 = vunpack.c.l.b16 %v1031
        %v1045 = vunpack.c.l.b16 %v1032
        %v1046 = vpack.c.b16 %v1043, %v1042
        %v1047 = vpack.c.b16 %v1045, %v1044
        %1050 = vmatpush.bf16.msra.mxu0 0
        %1051 = vmatpush.bf16.msra.mxu0 0
        %1052 = vmatpush.bf16.msra.mxu0 0
        %1053 = vmatpush.bf16.msra.mxu0 0
        %1054 = vmatpush.bf16.msra.mxu0 0
        %1055 = vmatpush.bf16.msra.mxu0 0
        %1056 = vmatpush.bf16.msra.mxu0 %v1047
        %1057 = vmatpush.bf16.msra.mxu0 %v1046
        %1058 = vmatmul.bf16.gmra.mxu0 %v653
        %v1059 = vpop.f32.mrf.mxu0
        %v1060 = vadd.f32 %v1036, %v1059
        %v1061 = vpop.f32.mrf.mxu0
        %1062 = vdwg.mxu0
        %s1063 = scalar_lea.vmem %s8, 32
        %v1064 = vld [vmem:[%s1063] sm:$0xf]
        %v1065 = vld [vmem:[%s1063 + $0x4] sm:$0xf]
        %v1066 = vld [vmem:[%s1063 + $0x8] sm:$0xf]
        %v1067 = vld [vmem:[%s1063 + $0xc] sm:$0xf]
        %s1068 = scalar_lea.vmem %s9, 2
        %v1069 = vld [vmem:[%s1068] sm:$0x1]
        %v1071 = vperm.slane %v1069, 0
        %v1077 = vunpack.c.l.b16 %v1064
        %v1078 = vunpack.c.l.b16 %v1065
        %v1079 = vunpack.c.l.b16 %v1066
        %v1080 = vunpack.c.l.b16 %v1067
        %v1081 = vpack.c.b16 %v1078, %v1077
        %v1082 = vpack.c.b16 %v1080, %v1079
        %1085 = vmatpush.bf16.msra.mxu0 0
        %1086 = vmatpush.bf16.msra.mxu0 0
        %1087 = vmatpush.bf16.msra.mxu0 0
        %1088 = vmatpush.bf16.msra.mxu0 0
        %1089 = vmatpush.bf16.msra.mxu0 0
        %1090 = vmatpush.bf16.msra.mxu0 0
        %1091 = vmatpush.bf16.msra.mxu0 %v1082
        %1092 = vmatpush.bf16.msra.mxu0 %v1081
        %1093 = vmatmul.bf16.gmra.mxu0 %v653
        %v1094 = vpop.f32.mrf.mxu0
        %v1095 = vadd.f32 %v1071, %v1094
        %v1096 = vpop.f32.mrf.mxu0
        %1097 = vdwg.mxu0
        %v1098 = vpack.c.bf16 %v1025, %v1025
        %v1099 = vpack.c.bf16 %v1060, %v1060
        %v1101 = vsel %vm739, %v1098, 0
        %v1104 = vsel %vm739, %v1099, 0
        %1106 = vmatpush.bf16.xpose.msra.mxu0 0
        %1107 = vmatpush.bf16.xpose.msra.mxu0 0
        %1108 = vmatpush.bf16.xpose.msra.mxu0 0
        %1109 = vmatpush.bf16.xpose.msra.mxu0 0
        %1110 = vmatpush.bf16.xpose.msra.mxu0 0
        %1111 = vmatpush.bf16.xpose.msra.mxu0 0
        %1112 = vmatpush.bf16.xpose.msra.mxu0 0
        %1113 = vmatpush.bf16.xpose.msra.mxu0 %v1104
        %1114 = vmatmul.bf16.gmra.mxu0 %v1101
        %v1115 = vpop.f32.mrf.mxu0
        %v1116 = vadd.f32 %v737, %v1115
        %v1117 = vpop.f32.mrf.mxu0
        %1118 = vdwg.mxu0
        %v1119 = vsel %vm739, %v1116, -inf
        %1120 = vmax.xlane.f32.xlu0 %v1119
        %v1121 = vpop.xlane.xlu0 %1120
        %v1122 = vsub.f32 %v1116, %v1121
        %v1123 = vmul.f32 %v1122, 1.442695
        %v1124 = vpow.pop %v1123
        %v1125 = vsel %vm739, %v1124, 0.0
        %1126 = vadd.xlane.f32.xlu0 %v1125
        %v1127 = vpop.xlane.xlu0 %1126
        %v1128 = vrcp.pop %v1127
        %v1129 = vmul.f32 %v1124, %v1128
        %v1130 = vpack.c.bf16 %v1129, %v1129
        %v1131 = vpack.c.bf16 %v1095, %v1095
        %v1133 = vsel %vm739, %v1130, 0
        %v1136 = vsel %vm775, %v1131, 0
        %1138 = vmatpush.bf16.msra.mxu0 0
        %1139 = vmatpush.bf16.msra.mxu0 0
        %1140 = vmatpush.bf16.msra.mxu0 0
        %1141 = vmatpush.bf16.msra.mxu0 0
        %1142 = vmatpush.bf16.msra.mxu0 0
        %1143 = vmatpush.bf16.msra.mxu0 0
        %1144 = vmatpush.bf16.msra.mxu0 0
        %1145 = vmatpush.bf16.msra.mxu0 %v1136
        %1146 = vmatmul.bf16.gmra.mxu0 %v1133
        %v1147 = vpop.f32.mrf.mxu0
        %v1148 = vadd.f32 0.0, %v1147
        %v1149 = vpop.f32.mrf.mxu0
        %1150 = vdwg.mxu0
        %v1151 = vpack.c.bf16 %v1148, %v1148
        %s1152 = scalar_lea.vmem %s10, 8
        %v1153 = vld [vmem:[%s1152] sm:$0xf]
        %v1155 = vsel %vm739, %v1151, 0
        %v1158 = vsel %vm775, %v1153, 0
        %1160 = vmatpush.bf16.msra.mxu0 0
        %1161 = vmatpush.bf16.msra.mxu0 0
        %1162 = vmatpush.bf16.msra.mxu0 0
        %1163 = vmatpush.bf16.msra.mxu0 0
        %1164 = vmatpush.bf16.msra.mxu0 0
        %1165 = vmatpush.bf16.msra.mxu0 0
        %1166 = vmatpush.bf16.msra.mxu0 0
        %1167 = vmatpush.bf16.msra.mxu0 %v1158
        %1168 = vmatmul.bf16.gmra.mxu0 %v1155
        %v1169 = vpop.f32.mrf.mxu0
        %v1170 = vadd.f32 0.0, %v1169
        %v1171 = vpop.f32.mrf.mxu0
        %1172 = vdwg.mxu0
        %v1173 = vadd.f32 %v990, %v1170
        %s1174 = scalar_lea.vmem %s4, 48
        %v1175 = vld [vmem:[%s1174] sm:$0xf]
        %v1176 = vld [vmem:[%s1174 + $0x4] sm:$0xf]
        %v1177 = vld [vmem:[%s1174 + $0x8] sm:$0xf]
        %v1178 = vld [vmem:[%s1174 + $0xc] sm:$0xf]
        %s1179 = scalar_lea.vmem %s5, 3
        %v1180 = vld [vmem:[%s1179] sm:$0x1]
        %v1182 = vperm.slane %v1180, 0
        %v1188 = vunpack.c.l.b16 %v1175
        %v1189 = vunpack.c.l.b16 %v1176
        %v1190 = vunpack.c.l.b16 %v1177
        %v1191 = vunpack.c.l.b16 %v1178
        %v1192 = vpack.c.b16 %v1189, %v1188
        %v1193 = vpack.c.b16 %v1191, %v1190
        %1196 = vmatpush.bf16.msra.mxu0 0
        %1197 = vmatpush.bf16.msra.mxu0 0
        %1198 = vmatpush.bf16.msra.mxu0 0
        %1199 = vmatpush.bf16.msra.mxu0 0
        %1200 = vmatpush.bf16.msra.mxu0 0
        %1201 = vmatpush.bf16.msra.mxu0 0
        %1202 = vmatpush.bf16.msra.mxu0 %v1193
        %1203 = vmatpush.bf16.msra.mxu0 %v1192
        %1204 = vmatmul.bf16.gmra.mxu0 %v653
        %v1205 = vpop.f32.mrf.mxu0
        %v1206 = vadd.f32 %v1182, %v1205
        %v1207 = vpop.f32.mrf.mxu0
        %1208 = vdwg.mxu0
        %s1209 = scalar_lea.vmem %s6, 48
        %v1210 = vld [vmem:[%s1209] sm:$0xf]
        %v1211 = vld [vmem:[%s1209 + $0x4] sm:$0xf]
        %v1212 = vld [vmem:[%s1209 + $0x8] sm:$0xf]
        %v1213 = vld [vmem:[%s1209 + $0xc] sm:$0xf]
        %s1214 = scalar_lea.vmem %s7, 3
        %v1215 = vld [vmem:[%s1214] sm:$0x1]
        %v1217 = vperm.slane %v1215, 0
        %v1223 = vunpack.c.l.b16 %v1210
        %v1224 = vunpack.c.l.b16 %v1211
        %v1225 = vunpack.c.l.b16 %v1212
        %v1226 = vunpack.c.l.b16 %v1213
        %v1227 = vpack.c.b16 %v1224, %v1223
        %v1228 = vpack.c.b16 %v1226, %v1225
        %1231 = vmatpush.bf16.msra.mxu0 0
        %1232 = vmatpush.bf16.msra.mxu0 0
        %1233 = vmatpush.bf16.msra.mxu0 0
        %1234 = vmatpush.bf16.msra.mxu0 0
        %1235 = vmatpush.bf16.msra.mxu0 0
        %1236 = vmatpush.bf16.msra.mxu0 0
        %1237 = vmatpush.bf16.msra.mxu0 %v1228
        %1238 = vmatpush.bf16.msra.mxu0 %v1227
        %1239 = vmatmul.bf16.gmra.mxu0 %v653
        %v1240 = vpop.f32.mrf.mxu0
        %v1241 = vadd.f32 %v1217, %v1240
        %v1242 = vpop.f32.mrf.mxu0
        %1243 = vdwg.mxu0
        %s1244 = scalar_lea.vmem %s8, 48
        %v1245 = vld [vmem:[%s1244] sm:$0xf]
        %v1246 = vld [vmem:[%s1244 + $0x4] sm:$0xf]
        %v1247 = vld [vmem:[%s1244 + $0x8] sm:$0xf]
        %v1248 = vld [vmem:[%s1244 + $0xc] sm:$0xf]
        %s1249 = scalar_lea.vmem %s9, 3
        %v1250 = vld [vmem:[%s1249] sm:$0x1]
        %v1252 = vperm.slane %v1250, 0
        %v1258 = vunpack.c.l.b16 %v1245
        %v1259 = vunpack.c.l.b16 %v1246
        %v1260 = vunpack.c.l.b16 %v1247
        %v1261 = vunpack.c.l.b16 %v1248
        %v1262 = vpack.c.b16 %v1259, %v1258
        %v1263 = vpack.c.b16 %v1261, %v1260
        %1266 = vmatpush.bf16.msra.mxu0 0
        %1267 = vmatpush.bf16.msra.mxu0 0
        %1268 = vmatpush.bf16.msra.mxu0 0
        %1269 = vmatpush.bf16.msra.mxu0 0
        %1270 = vmatpush.bf16.msra.mxu0 0
        %1271 = vmatpush.bf16.msra.mxu0 0
        %1272 = vmatpush.bf16.msra.mxu0 %v1263
        %1273 = vmatpush.bf16.msra.mxu0 %v1262
        %1274 = vmatmul.bf16.gmra.mxu0 %v653
        %v1275 = vpop.f32.mrf.mxu0
        %v1276 = vadd.f32 %v1252, %v1275
        %v1277 = vpop.f32.mrf.mxu0
        %1278 = vdwg.mxu0
        %v1279 = vpack.c.bf16 %v1206, %v1206
        %v1280 = vpack.c.bf16 %v1241, %v1241
        %v1282 = vsel %vm739, %v1279, 0
        %v1285 = vsel %vm739, %v1280, 0
        %1287 = vmatpush.bf16.xpose.msra.mxu0 0
        %1288 = vmatpush.bf16.xpose.msra.mxu0 0
        %1289 = vmatpush.bf16.xpose.msra.mxu0 0
        %1290 = vmatpush.bf16.xpose.msra.mxu0 0
        %1291 = vmatpush.bf16.xpose.msra.mxu0 0
        %1292 = vmatpush.bf16.xpose.msra.mxu0 0
        %1293 = vmatpush.bf16.xpose.msra.mxu0 0
        %1294 = vmatpush.bf16.xpose.msra.mxu0 %v1285
        %1295 = vmatmul.bf16.gmra.mxu0 %v1282
        %v1296 = vpop.f32.mrf.mxu0
        %v1297 = vadd.f32 %v737, %v1296
        %v1298 = vpop.f32.mrf.mxu0
        %1299 = vdwg.mxu0
        %v1300 = vsel %vm739, %v1297, -inf
        %1301 = vmax.xlane.f32.xlu0 %v1300
        %v1302 = vpop.xlane.xlu0 %1301
        %v1303 = vsub.f32 %v1297, %v1302
        %v1304 = vmul.f32 %v1303, 1.442695
        %v1305 = vpow.pop %v1304
        %v1306 = vsel %vm739, %v1305, 0.0
        %1307 = vadd.xlane.f32.xlu0 %v1306
        %v1308 = vpop.xlane.xlu0 %1307
        %v1309 = vrcp.pop %v1308
        %v1310 = vmul.f32 %v1305, %v1309
        %v1311 = vpack.c.bf16 %v1310, %v1310
        %v1312 = vpack.c.bf16 %v1276, %v1276
        %v1314 = vsel %vm739, %v1311, 0
        %v1317 = vsel %vm775, %v1312, 0
        %1319 = vmatpush.bf16.msra.mxu0 0
        %1320 = vmatpush.bf16.msra.mxu0 0
        %1321 = vmatpush.bf16.msra.mxu0 0
        %1322 = vmatpush.bf16.msra.mxu0 0
        %1323 = vmatpush.bf16.msra.mxu0 0
        %1324 = vmatpush.bf16.msra.mxu0 0
        %1325 = vmatpush.bf16.msra.mxu0 0
        %1326 = vmatpush.bf16.msra.mxu0 %v1317
        %1327 = vmatmul.bf16.gmra.mxu0 %v1314
        %v1328 = vpop.f32.mrf.mxu0
        %v1329 = vadd.f32 0.0, %v1328
        %v1330 = vpop.f32.mrf.mxu0
        %1331 = vdwg.mxu0
        %v1332 = vpack.c.bf16 %v1329, %v1329
        %s1333 = scalar_lea.vmem %s10, 12
        %v1334 = vld [vmem:[%s1333] sm:$0xf]
        %v1336 = vsel %vm739, %v1332, 0
        %v1339 = vsel %vm775, %v1334, 0
        %1341 = vmatpush.bf16.msra.mxu0 0
        %1342 = vmatpush.bf16.msra.mxu0 0
        %1343 = vmatpush.bf16.msra.mxu0 0
        %1344 = vmatpush.bf16.msra.mxu0 0
        %1345 = vmatpush.bf16.msra.mxu0 0
        %1346 = vmatpush.bf16.msra.mxu0 0
        %1347 = vmatpush.bf16.msra.mxu0 0
        %1348 = vmatpush.bf16.msra.mxu0 %v1339
        %1349 = vmatmul.bf16.gmra.mxu0 %v1336
        %v1350 = vpop.f32.mrf.mxu0
        %v1351 = vadd.f32 0.0, %v1350
        %v1352 = vpop.f32.mrf.mxu0
        %1353 = vdwg.mxu0
        %v1354 = vadd.f32 %v1173, %v1351
        %v1355 = vld [vmem:[%s11] sm:$0x1]
        %v1357 = vperm.slane %v1355, 0
        %v1359 = vadd.f32 %v1354, %v1357
        %v1360 = vadd.f32 %v587, %v1359
        %v1361 = vld [vmem:[%s12] sm:$0x1]
        %v1362 = vld [vmem:[%s13] sm:$0x1]
        %v1363 = vsel %vm593, %v1360, 0.0
        %1364 = vadd.xlane.f32.xlu0 %v1363
        %v1365 = vpop.xlane.xlu0 %1364
        %v1366 = vmul.f32 %v1365, %v603
        %v1367 = vsub.f32 %v1360, %v1366
        %v1368 = vmul.f32 %v1367, %v1367
        %v1369 = vsel %vm593, %v1368, 0.0
        %1370 = vadd.xlane.f32.xlu0 %v1369
        %v1371 = vpop.xlane.xlu0 %1370
        %v1372 = vmul.f32 %v1371, %v603
        %v1373 = vadd.f32 %v1372, 1e-05
        %v1374 = vrsqrt.pop %v1373
        %v1375 = vmul.f32 %v1374, %v1373
        %v1376 = vmul.f32 %v1375, %v1374
        %v1377 = vmul.f32 0.5, %v1376
        %v1378 = vsub.f32 1.5, %v1377
        %v1379 = vmul.f32 %v1374, %v1378
        %vm1380 = vweird.f32 %v1373
        %vm1381 = vweird.f32 %v1374
        %vm1382 = vmor %vm1380, %vm1381
        %v1383 = vsel %vm1382, %v1374, %v1379
        %v1384 = vmul.f32 %v1367, %v1383
        %v1386 = vperm.slane %v1361, 0
        %v1388 = vmul.f32 %v1384, %v1386
        %v1390 = vperm.slane %v1362, 0
        %v1392 = vadd.f32 %v1388, %v1390
        %v1393 = vpack.c.bf16 %v1392, %v1392
        %v1394 = vld [vmem:[%s14] sm:$0xf]
        %v1395 = vld [vmem:[%s14 + $0x4] sm:$0xf]
        %v1396 = vld [vmem:[%s14 + $0x8] sm:$0xf]
        %v1397 = vld [vmem:[%s14 + $0xc] sm:$0xf]
        %v1398 = vld [vmem:[%s15] sm:$0x1]
        %v1400 = vperm.slane %v1398, 0
        %v1406 = vunpack.c.l.b16 %v1394
        %v1407 = vunpack.c.l.b16 %v1395
        %v1408 = vunpack.c.l.b16 %v1396
        %v1409 = vunpack.c.l.b16 %v1397
        %v1410 = vpack.c.b16 %v1407, %v1406
        %v1411 = vpack.c.b16 %v1409, %v1408
        %v1415 = vsel %vm593, %v1393, 0
        %1417 = vmatpush.bf16.msra.mxu0 0
        %1418 = vmatpush.bf16.msra.mxu0 0
        %1419 = vmatpush.bf16.msra.mxu0 0
        %1420 = vmatpush.bf16.msra.mxu0 0
        %1421 = vmatpush.bf16.msra.mxu0 0
        %1422 = vmatpush.bf16.msra.mxu0 0
        %1423 = vmatpush.bf16.msra.mxu0 %v1411
        %1424 = vmatpush.bf16.msra.mxu0 %v1410
        %1425 = vmatmul.bf16.gmra.mxu0 %v1415
        %v1426 = vpop.f32.mrf.mxu0
        %v1427 = vadd.f32 %v1400, %v1426
        %v1428 = vpop.f32.mrf.mxu0
        %1429 = vdwg.mxu0
        %v1430 = vmax.f32 %v1427, 0.0
        %v1431 = vpack.c.bf16 %v1430, %v1430
        %v1432 = vld [vmem:[%s16] sm:$0xf]
        %v1433 = vld [vmem:[%s16 + $0x4] sm:$0xf]
        %v1434 = vld [vmem:[%s16 + $0x8] sm:$0xf]
        %v1435 = vld [vmem:[%s16 + $0xc] sm:$0xf]
        %v1436 = vld [vmem:[%s16 + $0x10] sm:$0xf]
        %v1437 = vld [vmem:[%s16 + $0x14] sm:$0xf]
        %v1438 = vld [vmem:[%s16 + $0x18] sm:$0xf]
        %v1439 = vld [vmem:[%s16 + $0x1c] sm:$0xf]
        %v1440 = vld [vmem:[%s17] sm:$0x1]
        %v1442 = vperm.slane %v1440, 0
        %v1452 = vunpack.c.l.b16 %v1432
        %v1453 = vunpack.c.l.b16 %v1433
        %v1454 = vunpack.c.l.b16 %v1434
        %v1455 = vunpack.c.l.b16 %v1435
        %v1456 = vunpack.c.l.b16 %v1436
        %v1457 = vunpack.c.l.b16 %v1437
        %v1458 = vunpack.c.l.b16 %v1438
        %v1459 = vunpack.c.l.b16 %v1439
        %v1460 = vpack.c.b16 %v1453, %v1452
        %v1461 = vpack.c.b16 %v1455, %v1454
        %v1462 = vpack.c.b16 %v1457, %v1456
        %v1463 = vpack.c.b16 %v1459, %v1458
        %vm1468 = vcmask 523264
        %v1470 = vsel %vm1468, %v1431, 0
        %1472 = vmatpush.bf16.msra.mxu0 0
        %1473 = vmatpush.bf16.msra.mxu0 0
        %1474 = vmatpush.bf16.msra.mxu0 0
        %1475 = vmatpush.bf16.msra.mxu0 0
        %1476 = vmatpush.bf16.msra.mxu0 %v1463
        %1477 = vmatpush.bf16.msra.mxu0 %v1462
        %1478 = vmatpush.bf16.msra.mxu0 %v1461
        %1479 = vmatpush.bf16.msra.mxu0 %v1460
        %1480 = vmatmul.bf16.gmra.mxu0 %v1470
        %v1481 = vpop.f32.mrf.mxu0
        %v1482 = vadd.f32 %v1442, %v1481
        %v1483 = vpop.f32.mrf.mxu0
        %1484 = vdwg.mxu0
        %v1485 = vadd.f32 %v1360, %v1482
        %v1486 = vpack.c.bf16 %v1485, %v1485
        %vm1487 = vcmask 257024
        %1488 = vst.msk [vmem:[%s577] sm:$0xf] %vm1487, %v1486
        %s1489 = sand.u32 %s428, 1
        %s1490 = scalar_lea.sflag [#allocation3], %s1489
        %s1491 = sand.u32 %s428, 1
        %s1492 = smul.addr %s1491, 4
        %s1493 = scalar_lea.vmem [#allocation2], %s1492
        // Predicated region
        $region93: #{tpu_custom_call.1} parent=91 // pred_check
          %p1494 = pneg %p438
        $region94: #{tpu_custom_call.1} parent=91 // pred_check_branch
          %1496 = sbr.rel (%p1494) target = $region96
        $region95: #{tpu_custom_call.1} parent=91 // pred_region
          %1498 = vsyncadd %s1490, 0
          %s1499 = smul.addr %s32, 4
          %s1500 = scalar_lea.hbm %s18, %s1499
          %s1502 = sshll.u32 %s1493, 4
          %s1503 = int_to_ptr.vmem [resolvable:$true] %s1502
          %s1504 = sshll.u32 %s1500, 4
          %s1505 = int_to_ptr.hbm [resolvable:$true] %s1504
          %1507 = dma.vmem_to_hbm [thread:$0]  %s1503, 64, %s1505, %s1490
        $region96: #{tpu_custom_call.1} parent=91 // pred_fallthru
          _
      $region92: #{tpu_custom_call.1} parent=5 // pred_fallthru
        _
      %p1508 = scmp.le.s32.totalorder 2, %s27
      // Predicated region
      $region97: #{tpu_custom_call.1} parent=5 // pred_check
        %p1509 = pneg %p1508
      $region98: #{tpu_custom_call.1} parent=5 // pred_check_branch
        %1511 = sbr.rel (%p1509) target = $region100
      $region99: #{tpu_custom_call.1} parent=5 // pred_region
        %s1512 = ssub.s32 %s27, 2
        // Predicated region
        $region101: #{tpu_custom_call.1} parent=99 // pred_check
          %p1513 = pneg %p444
        $region102: #{tpu_custom_call.1} parent=99 // pred_check_branch
          %1515 = sbr.rel (%p1513) target = $region104
        $region103: #{tpu_custom_call.1} parent=99 // pred_region
          %s1516 = sand.u32 %s429, 1
          %s1517 = scalar_lea.sflag [#allocation3], %s1516
          %s1518 = sand.u32 %s429, 1
          %s1519 = smul.addr %s1518, 4
          %s1520 = scalar_lea.vmem [#allocation2], %s1519
          %1522 = dma.done %s1517, 64
        $region104: #{tpu_custom_call.1} parent=99 // pred_fallthru
          _
      $region100: #{tpu_custom_call.1} parent=5 // pred_fallthru
        _
    $region6: #{tpu_custom_call.1} parent=1 // loop_footer
      %s31 = sadd.s32 1, %s27
    $region7: #{tpu_custom_call.1} parent=1 // loop_footer_branch
      %26 = sbr.rel target = $region3
    $region8: #{tpu_custom_call.1} parent=1 // loop_exit
      _
    %1523 = vsyncpa [#allocation3], 1
    %s1524 = scalar_lea.sflag [#allocation3], 1
    %1525 = vsyncpa %s1524, 1

</llo_original>
